<compile_context>
chip_gen: v6e
topology: v6e:2x2x1
jax: 0.10.0
libtpu: 0.0.40
codegen_flags: <defaults>
</compile_context>

<pallas_src>
import math
from functools import partial

import jax
import jax.numpy as jnp
from jax.experimental import pallas as pl
from jax.experimental.pallas import tpu as pltpu


_TAPS = tuple((dy, dx) for dy in range(3) for dx in range(3))


def bottleneck_kernel(x_ref, w1_ref, b1_ref, w2_ref, b2_ref,
                      w3a_ref, w3b_ref, b3_ref, o_ref, *scratch,
                      H, W, NB, per_tap):
    """NB batch images per grid step.

    x_ref  : (NB, Cin, HWp)  bf16, spatial (padded to a 128-lane multiple)
    w1     : (Cb, Cin)       bf16  1x1 conv, BN1 scale folded in
    w2     : per_tap -> (9, Cb, Cb) bf16 ; else (Cb, 9*Cb) bf16 (im2col layout)
    w3a/w3b: (Cout, Cb)/(Cout, Cin) bf16  conv3 / 1x1-downsample, BN folded
    b*     : (C, 1) f32 folded BN biases (b3 = bn3 bias + downsample-bn bias)
    o_ref  : (NB, Cout, HWp)
    scratch: () when per_tap, else (col_ref,) with col shaped (9*Cb, HWp)
    """
    Cb = w1_ref.shape[0]
    HWp = x_ref.shape[-1]
    col_ref = None if per_tap else scratch[0]

    # Border masks for the 3x3 taps (flat spatial index, shared by all NB
    # images in this step).  Lane-padding positions are never an unmasked
    # neighbour of a real position, so they cannot leak into real outputs.
    pid = jax.lax.broadcasted_iota(jnp.int32, (1, HWp), 1)
    cx = pid % W
    not_top = pid >= W
    not_bot = pid < (H - 1) * W
    not_left = cx > 0
    not_right = cx < (W - 1)

    def tap_mask(dy, dx):
        conds = []
        if dy == 0:
            conds.append(not_top)
        elif dy == 2:
            conds.append(not_bot)
        if dx == 0:
            conds.append(not_left)
        elif dx == 2:
            conds.append(not_right)
        if not conds:
            return None
        m = conds[0]
        for c in conds[1:]:
            m = jnp.logical_and(m, c)
        return m

    masks = [tap_mask(dy, dx) for dy, dx in _TAPS]

    for b in range(NB):                                   # NB small & static
        x = x_ref[b]                                      # (Cin, HWp) bf16

        # ---- conv1 (1x1) + bn1 + relu -----------------------------------
        y1 = jnp.dot(w1_ref[...], x, preferred_element_type=jnp.float32)
        y1 = jnp.maximum(y1 + b1_ref[...], 0.0)           # (Cb, HWp) f32

        # ---- conv2 (3x3, stride 1, pad 1) + bn2 + relu --------------------
        # Taps are lane rolls of y1 (XLU) + border masks (VPU): no padded
        # scratch image and no per-tap relayout copies.
        y2 = None
        for t, (dy, dx) in enumerate(_TAPS):
            off = (dy - 1) * W + (dx - 1)                 # flat HW offset
            tap = y1 if off == 0 else pltpu.roll(y1, shift=(-off) % HWp, axis=1)
            if masks[t] is not None:
                tap = jnp.where(masks[t], tap, 0.0)
            if per_tap:
                # K = Cb accumulating matmul per tap: no col scratch traffic,
                # the roll/mask of tap t+1 overlaps the matmul of tap t.
                d = jnp.dot(w2_ref[t], tap.astype(jnp.bfloat16),
                            preferred_element_type=jnp.float32)
                y2 = d if y2 is None else y2 + d
            else:
                # Small Cb: build the im2col buffer so the single MXU matmul
                # keeps a contraction of 9*Cb.
                col_ref[t * Cb:(t + 1) * Cb, :] = tap.astype(col_ref.dtype)
        if not per_tap:
            y2 = jnp.dot(w2_ref[...], col_ref[...].astype(jnp.bfloat16),
                         preferred_element_type=jnp.float32)
        y2 = jnp.maximum(y2 + b2_ref[...], 0.0)           # (Cb, HWp) f32

        # ---- conv3+bn3, 1x1-downsample+bn, residual add, relu -------------
        # Two accumulating matmuls instead of a (Cb+Cin, HWp) concat buffer.
        y3 = jnp.dot(w3a_ref[...], y2.astype(jnp.bfloat16),
                     preferred_element_type=jnp.float32)
        y3 = y3 + jnp.dot(w3b_ref[...], x, preferred_element_type=jnp.float32)
        o_ref[b] = jnp.maximum(y3 + b3_ref[...], 0.0).astype(o_ref.dtype)


def fold_bn(gamma, beta, mean, var, eps=1e-5):
    scale = gamma / jnp.sqrt(var + eps)
    bias = beta - mean * scale
    return scale, bias


def bottleneck_forward(x_nchw, p, *, conv2_per_tap=None):
    """Pallas forward pass.  x_nchw: (N, Cin, H, W) -> (N, 4*Cb, H, W)."""
    N, Cin, H, W = x_nchw.shape
    Cb = p['conv1_w'].shape[0]
    Cout = 4 * Cb
    HW = H * W
    HWp = ((HW + 127) // 128) * 128      # lane-dense (unmasked vst) stores
    NB = math.gcd(N, 4)                  # images per grid step (amortize overhead)

    if conv2_per_tap is None:
        # Per-tap accumulation only once its contraction (K = Cb) is wide
        # enough to feed the MXU (v5e is 128x128); otherwise keep the single
        # 9*Cb-contraction im2col matmul.
        conv2_per_tap = Cb >= 128

    # NCHW -> (N, Cin, HW): pure reshape; cast to bf16 (halves HBM DMA bytes);
    # zero-pad spatial up to a 128-lane multiple.
    x_flat = x_nchw.reshape(N, Cin, HW).astype(jnp.bfloat16)
    if HWp != HW:
        x_flat = jnp.pad(x_flat, ((0, 0), (0, 0), (0, HWp - HW)))

    s1, b1 = fold_bn(p['bn1_g'], p['bn1_b'], p['bn1_m'], p['bn1_v'])
    s2, b2 = fold_bn(p['bn2_g'], p['bn2_b'], p['bn2_m'], p['bn2_v'])
    s3, b3 = fold_bn(p['bn3_g'], p['bn3_b'], p['bn3_m'], p['bn3_v'])
    sd, bd = fold_bn(p['bnd_g'], p['bnd_b'], p['bnd_m'], p['bnd_v'])

    # Fold BN scales into the conv weights (eval-mode BN); weights in bf16.
    w1m = (p['conv1_w'][:, :, 0, 0] * s1[:, None]).astype(jnp.bfloat16)
    if conv2_per_tap:
        # (Cb, Cb, 3, 3) -> (3, 3, Cout, Cin) -> (9, Cb, Cb): w2[t, cout, cin].
        w2m = (jnp.transpose(p['conv2_w'], (2, 3, 0, 1))
               * s2[None, None, :, None]).reshape(9, Cb, Cb).astype(jnp.bfloat16)
        scratch = []
    else:
        # (Cb, Cb, 3, 3) -> (Cout, 3, 3, Cin) -> (Cb, 9*Cb); column order is
        # t*Cb + cin with t = dy*3 + dx, matching the im2col row order.
        w2m = ((jnp.transpose(p['conv2_w'], (0, 2, 3, 1)).reshape(Cb, 9 * Cb))
               * s2[:, None]).astype(jnp.bfloat16)
        # bf16 col only when Cb is a multiple of the bf16 sublane tile (16) so
        # the 9 tap stores stay aligned; otherwise keep f32 (tile of 8).
        col_dtype = jnp.bfloat16 if Cb % 16 == 0 else jnp.float32
        scratch = [pltpu.VMEM((9 * Cb, HWp), col_dtype)]
    w3a = (p['conv3_w'][:, :, 0, 0] * s3[:, None]).astype(jnp.bfloat16)   # (Cout, Cb)
    w3b = (p['convd_w'][:, :, 0, 0] * sd[:, None]).astype(jnp.bfloat16)   # (Cout, Cin)
    b1c = b1[:, None]                                                     # (Cb, 1) f32
    b2c = b2[:, None]                                                     # (Cb, 1) f32
    b3c = (b3 + bd)[:, None]                                              # (Cout, 1) f32

    def const_spec(arr):
        # Grid-invariant weights/biases: single-buffer so they are not
        # duplicated in VMEM (matters at real ResNet sizes on v7x's 64 MiB).
        nd = arr.ndim
        return pl.BlockSpec(arr.shape, lambda n, _nd=nd: (0,) * _nd,
                            pipeline_mode=pl.Buffered(1))

    out_flat = pl.pallas_call(
        partial(bottleneck_kernel, H=H, W=W, NB=NB, per_tap=conv2_per_tap),
        out_shape=jax.ShapeDtypeStruct((N, Cout, HWp), x_nchw.dtype),
        grid_spec=pltpu.PrefetchScalarGridSpec(
            num_scalar_prefetch=0,
            grid=(N // NB,),
            in_specs=[
                pl.BlockSpec((NB, Cin, HWp), lambda n: (n, 0, 0)),   # x
                const_spec(w1m), const_spec(b1c),                    # conv1/bn1
                const_spec(w2m), const_spec(b2c),                    # conv2/bn2
                const_spec(w3a), const_spec(w3b), const_spec(b3c),   # conv3+ds
            ],
            out_specs=pl.BlockSpec((NB, Cout, HWp), lambda n: (n, 0, 0)),
            scratch_shapes=scratch,
        ),
        compiler_params=pltpu.CompilerParams(
            dimension_semantics=("parallel",),           # megacore over batch
            vmem_limit_bytes=48 * 1024 * 1024),
    )(x_flat, w1m, b1c, w2m, b2c, w3a, w3b, b3c)

    if HWp != HW:
        out_flat = out_flat[..., :HW]
    return out_flat.reshape(N, Cout, H, W)               # pure reshape


def reference_forward(x, p, eps=1e-5):
    """Plain-JAX reference mirroring the PyTorch forward (eval-mode BN)."""
    def conv(x, w, stride=1, pad=0):
        return jax.lax.conv_general_dilated(
            x, w, (stride, stride), [(pad, pad), (pad, pad)],
            dimension_numbers=('NCHW', 'OIHW', 'NCHW'))

    def bn(x, g, b, m, v):
        s = (g / jnp.sqrt(v + eps))[None, :, None, None]
        return (x - m[None, :, None, None]) * s + b[None, :, None, None]

    out = jax.nn.relu(bn(conv(x, p['conv1_w']),
                         p['bn1_g'], p['bn1_b'], p['bn1_m'], p['bn1_v']))
    out = jax.nn.relu(bn(conv(out, p['conv2_w'], pad=1),
                         p['bn2_g'], p['bn2_b'], p['bn2_m'], p['bn2_v']))
    out = bn(conv(out, p['conv3_w']),
             p['bn3_g'], p['bn3_b'], p['bn3_m'], p['bn3_v'])
    identity = bn(conv(x, p['convd_w']),
                  p['bnd_g'], p['bnd_b'], p['bnd_m'], p['bnd_v'])
    return jax.nn.relu(out + identity)


def make_params(key, in_channels, bottleneck_channels):
    Cb = bottleneck_channels
    Cout = 4 * Cb
    keys = jax.random.split(key, 20)
    k = iter(keys)

    def bn_params(c):
        return (1.0 + 0.1 * jax.random.normal(next(k), (c,), jnp.float32),  # gamma
                0.1 * jax.random.normal(next(k), (c,), jnp.float32),        # beta
                0.1 * jax.random.normal(next(k), (c,), jnp.float32),        # running_mean
                0.5 + jax.random.uniform(next(k), (c,), jnp.float32))       # running_var

    p = {}
    p['conv1_w'] = 0.2 * jax.random.normal(next(k), (Cb, in_channels, 1, 1), jnp.float32)
    p['bn1_g'], p['bn1_b'], p['bn1_m'], p['bn1_v'] = bn_params(Cb)
    p['conv2_w'] = 0.2 * jax.random.normal(next(k), (Cb, Cb, 3, 3), jnp.float32)
    p['bn2_g'], p['bn2_b'], p['bn2_m'], p['bn2_v'] = bn_params(Cb)
    p['conv3_w'] = 0.2 * jax.random.normal(next(k), (Cout, Cb, 1, 1), jnp.float32)
    p['bn3_g'], p['bn3_b'], p['bn3_m'], p['bn3_v'] = bn_params(Cout)
    p['convd_w'] = 0.2 * jax.random.normal(next(k), (Cout, in_channels, 1, 1), jnp.float32)
    p['bnd_g'], p['bnd_b'], p['bnd_m'], p['bnd_v'] = bn_params(Cout)
    return p


if __name__ == "__main__":
    key = jax.random.PRNGKey(0)
    kx, kp, kx2, kp2 = jax.random.split(key, 4)

    # bf16 MXU datapath (f32 accumulation) vs. f32 reference => bf16-level tol.
    TOL = dict(rtol=5e-2, atol=5e-2)

    # Config A: CIFAR-like, Cb=8 -> auto path = single big-K im2col matmul
    # (f32 col scratch since Cb is not a multiple of the bf16 sublane tile).
    N, Cin, H, W = 2, 16, 16, 16
    Cb = 8
    x = jax.random.normal(kx, (N, Cin, H, W), jnp.float32)
    params = make_params(kp, Cin, Cb)
    ref = reference_forward(x, params)

    out = jax.block_until_ready(bottleneck_forward(x, params))
    assert out.shape == (N, 4 * Cb, H, W), out.shape
    assert jnp.allclose(out, ref, **TOL), float(jnp.max(jnp.abs(out - ref)))

    # Same config, forcing the per-tap-accumulation conv2 path (the Cb>=128
    # strategy) so both code paths are exercised.
    out_pt = jax.block_until_ready(
        bottleneck_forward(x, params, conv2_per_tap=True))
    assert jnp.allclose(out_pt, ref, **TOL), float(jnp.max(jnp.abs(out_pt - ref)))

    # Config B: non-128-multiple spatial (HW=64 -> padded to 128), bf16 col
    # scratch (Cb=16 is a bf16-sublane multiple), NB=1 with grid of 3.
    N2, Cin2, H2, W2, Cb2 = 3, 8, 8, 8, 16
    x2 = jax.random.normal(kx2, (N2, Cin2, H2, W2), jnp.float32)
    params2 = make_params(kp2, Cin2, Cb2)
    out2 = jax.block_until_ready(bottleneck_forward(x2, params2))
    ref2 = reference_forward(x2, params2)
    assert out2.shape == (N2, 4 * Cb2, H2, W2), out2.shape
    assert jnp.allclose(out2, ref2, **TOL), float(jnp.max(jnp.abs(out2 - ref2)))

    print("KERNEL_OK")
</pallas_src>

<mosaic_0001>
module attributes {stable_mosaic.version = 11 : i64} {
  func.func @bottleneck_kernel(%arg0: i32, %arg1: memref<2x16x256xbf16, #tpu.memory_space<vmem>>, %arg2: memref<8x16xbf16, #tpu.memory_space<vmem>>, %arg3: memref<8x1xf32, #tpu.memory_space<vmem>>, %arg4: memref<8x72xbf16, #tpu.memory_space<vmem>>, %arg5: memref<8x1xf32, #tpu.memory_space<vmem>>, %arg6: memref<32x8xbf16, #tpu.memory_space<vmem>>, %arg7: memref<32x16xbf16, #tpu.memory_space<vmem>>, %arg8: memref<32x1xf32, #tpu.memory_space<vmem>>, %arg9: memref<2x32x256xf32, #tpu.memory_space<vmem>>, %arg10: memref<72x256xf32, #tpu.memory_space<vmem>>) attributes {dimension_semantics = [#tpu.dimension_semantics<parallel>], iteration_bounds = array<i64: 1>, scalar_prefetch = 0 : i64, scratch_operands = 1 : i64, tpu.core_type = #tpu.core_type<tc>, window_params = [{transform_indices = @transform_0, window_bounds = array<i64: 2, 16, 256>}, {pipeline_mode = #tpu.pipeline_mode<synchronous>, transform_indices = @transform_1, window_bounds = array<i64: 8, 16>}, {pipeline_mode = #tpu.pipeline_mode<synchronous>, transform_indices = @transform_2, window_bounds = array<i64: 8, 1>}, {pipeline_mode = #tpu.pipeline_mode<synchronous>, transform_indices = @transform_3, window_bounds = array<i64: 8, 72>}, {pipeline_mode = #tpu.pipeline_mode<synchronous>, transform_indices = @transform_4, window_bounds = array<i64: 8, 1>}, {pipeline_mode = #tpu.pipeline_mode<synchronous>, transform_indices = @transform_5, window_bounds = array<i64: 32, 8>}, {pipeline_mode = #tpu.pipeline_mode<synchronous>, transform_indices = @transform_6, window_bounds = array<i64: 32, 16>}, {pipeline_mode = #tpu.pipeline_mode<synchronous>, transform_indices = @transform_7, window_bounds = array<i64: 32, 1>}, {transform_indices = @transform_8, window_bounds = array<i64: 2, 32, 256>}]} {
    %0 = tpu.iota {dimensions = array<i32: 1>} : vector<1x256xi32>
    %c16_i32 = arith.constant 16 : i32
    %c0_i32 = arith.constant 0 : i32
    %1 = arith.cmpi eq, %c16_i32, %c0_i32 : i32
    %c1_i32 = arith.constant 1 : i32
    %2 = arith.select %1, %c1_i32, %c16_i32 : i32
    %3 = vector.broadcast %2 : i32 to vector<1x256xi32>
    %4 = arith.remsi %0, %3 : vector<1x256xi32>
    %c0_i32_0 = arith.constant 0 : i32
    %5 = vector.broadcast %c0_i32_0 : i32 to vector<1x256xi32>
    %6 = arith.cmpi ne, %4, %5 : vector<1x256xi32>
    %c0_i32_1 = arith.constant 0 : i32
    %7 = vector.broadcast %c0_i32_1 : i32 to vector<1x256xi32>
    %8 = arith.cmpi slt, %4, %7 : vector<1x256xi32>
    %c0_i32_2 = arith.constant 0 : i32
    %9 = arith.cmpi slt, %2, %c0_i32_2 : i32
    %10 = vector.broadcast %9 : i1 to vector<1x256xi1>
    %11 = vector.broadcast %10 : vector<1x256xi1> to vector<1x256xi1>
    %12 = arith.xori %8, %11 : vector<1x256xi1>
    %13 = arith.andi %12, %6 : vector<1x256xi1>
    %14 = vector.broadcast %2 : i32 to vector<1x256xi32>
    %15 = arith.addi %4, %14 : vector<1x256xi32>
    %16 = arith.select %13, %15, %4 : vector<1x256xi1>, vector<1x256xi32>
    %c16_i32_3 = arith.constant 16 : i32
    %17 = vector.broadcast %c16_i32_3 : i32 to vector<1x256xi32>
    %18 = arith.cmpi sge, %0, %17 : vector<1x256xi32>
    %c240_i32 = arith.constant 240 : i32
    %19 = vector.broadcast %c240_i32 : i32 to vector<1x256xi32>
    %20 = arith.cmpi slt, %0, %19 : vector<1x256xi32>
    %c0_i32_4 = arith.constant 0 : i32
    %21 = vector.broadcast %c0_i32_4 : i32 to vector<1x256xi32>
    %22 = arith.cmpi sgt, %16, %21 : vector<1x256xi32>
    %c15_i32 = arith.constant 15 : i32
    %23 = vector.broadcast %c15_i32 : i32 to vector<1x256xi32>
    %24 = arith.cmpi slt, %16, %23 : vector<1x256xi32>
    %25 = arith.andi %18, %22 : vector<1x256xi1>
    %26 = arith.andi %18, %24 : vector<1x256xi1>
    %27 = arith.andi %20, %22 : vector<1x256xi1>
    %28 = arith.andi %20, %24 : vector<1x256xi1>
    %c0 = arith.constant 0 : index
    %c0_5 = arith.constant 0 : index
    %c0_6 = arith.constant 0 : index
    %29 = vector.load %arg1[%c0, %c0_5, %c0_6] : memref<2x16x256xbf16, #tpu.memory_space<vmem>>, vector<1x16x256xbf16>
    %30 = vector.shape_cast %29 : vector<1x16x256xbf16> to vector<16x256xbf16>
    %c0_7 = arith.constant 0 : index
    %c0_8 = arith.constant 0 : index
    %31 = vector.load %arg2[%c0_7, %c0_8] : memref<8x16xbf16, #tpu.memory_space<vmem>>, vector<8x16xbf16>
    %cst = arith.constant dense<0.000000e+00> : vector<8x256xf32>
    %32 = tpu.matmul %31, %30, %cst {dimension_numbers = #tpu.dot_dimension_numbers<[1], [0], [0], [1], [0, 0, 1, 1], [], []>} : vector<8x16xbf16>, vector<16x256xbf16>, vector<8x256xf32> -> vector<8x256xf32>
    %c0_9 = arith.constant 0 : index
    %c0_10 = arith.constant 0 : index
    %33 = vector.load %arg3[%c0_9, %c0_10] : memref<8x1xf32, #tpu.memory_space<vmem>>, vector<8x1xf32>
    %34 = vector.broadcast %33 : vector<8x1xf32> to vector<8x256xf32>
    %35 = arith.addf %32, %34 : vector<8x256xf32>
    %cst_11 = arith.constant 0.000000e+00 : f32
    %36 = vector.broadcast %cst_11 : f32 to vector<8x256xf32>
    %37 = arith.maximumf %35, %36 : vector<8x256xf32>
    %c17_i32 = arith.constant 17 : i32
    %38 = tpu.dynamic_rotate %37 by %c17_i32 dim 1 : vector<8x256xf32>, i32 -> vector<8x256xf32>
    %cst_12 = arith.constant 0.000000e+00 : f32
    %39 = vector.shape_cast %25 : vector<1x256xi1> to vector<1x256xi1>
    %40 = vector.broadcast %39 : vector<1x256xi1> to vector<8x256xi1>
    %41 = vector.broadcast %cst_12 : f32 to vector<8x256xf32>
    %42 = arith.select %40, %38, %41 : vector<8x256xi1>, vector<8x256xf32>
    %c0_13 = arith.constant 0 : index
    %c0_14 = arith.constant 0 : index
    %43 = vector.load %arg10[%c0_13, %c0_14] : memref<72x256xf32, #tpu.memory_space<vmem>>, vector<8x256xf32>
    tpu.vector_store %arg10[%c0_13, %c0_14], %42 {strides = array<i32>} : memref<72x256xf32, #tpu.memory_space<vmem>>, vector<8x256xf32>,
    %c16_i32_15 = arith.constant 16 : i32
    %44 = tpu.dynamic_rotate %37 by %c16_i32_15 dim 1 : vector<8x256xf32>, i32 -> vector<8x256xf32>
    %cst_16 = arith.constant 0.000000e+00 : f32
    %45 = vector.shape_cast %18 : vector<1x256xi1> to vector<1x256xi1>
    %46 = vector.broadcast %45 : vector<1x256xi1> to vector<8x256xi1>
    %47 = vector.broadcast %cst_16 : f32 to vector<8x256xf32>
    %48 = arith.select %46, %44, %47 : vector<8x256xi1>, vector<8x256xf32>
    %c8 = arith.constant 8 : index
    %c0_17 = arith.constant 0 : index
    %49 = vector.load %arg10[%c8, %c0_17] : memref<72x256xf32, #tpu.memory_space<vmem>>, vector<8x256xf32>
    tpu.vector_store %arg10[%c8, %c0_17], %48 {strides = array<i32>} : memref<72x256xf32, #tpu.memory_space<vmem>>, vector<8x256xf32>,
    %c15_i32_18 = arith.constant 15 : i32
    %50 = tpu.dynamic_rotate %37 by %c15_i32_18 dim 1 : vector<8x256xf32>, i32 -> vector<8x256xf32>
    %cst_19 = arith.constant 0.000000e+00 : f32
    %51 = vector.shape_cast %26 : vector<1x256xi1> to vector<1x256xi1>
    %52 = vector.broadcast %51 : vector<1x256xi1> to vector<8x256xi1>
    %53 = vector.broadcast %cst_19 : f32 to vector<8x256xf32>
    %54 = arith.select %52, %50, %53 : vector<8x256xi1>, vector<8x256xf32>
    %c16 = arith.constant 16 : index
    %c0_20 = arith.constant 0 : index
    %55 = vector.load %arg10[%c16, %c0_20] : memref<72x256xf32, #tpu.memory_space<vmem>>, vector<8x256xf32>
    tpu.vector_store %arg10[%c16, %c0_20], %54 {strides = array<i32>} : memref<72x256xf32, #tpu.memory_space<vmem>>, vector<8x256xf32>,
    %c1_i32_21 = arith.constant 1 : i32
    %56 = tpu.dynamic_rotate %37 by %c1_i32_21 dim 1 : vector<8x256xf32>, i32 -> vector<8x256xf32>
    %cst_22 = arith.constant 0.000000e+00 : f32
    %57 = vector.shape_cast %22 : vector<1x256xi1> to vector<1x256xi1>
    %58 = vector.broadcast %57 : vector<1x256xi1> to vector<8x256xi1>
    %59 = vector.broadcast %cst_22 : f32 to vector<8x256xf32>
    %60 = arith.select %58, %56, %59 : vector<8x256xi1>, vector<8x256xf32>
    %c24 = arith.constant 24 : index
    %c0_23 = arith.constant 0 : index
    %61 = vector.load %arg10[%c24, %c0_23] : memref<72x256xf32, #tpu.memory_space<vmem>>, vector<8x256xf32>
    tpu.vector_store %arg10[%c24, %c0_23], %60 {strides = array<i32>} : memref<72x256xf32, #tpu.memory_space<vmem>>, vector<8x256xf32>,
    %c32 = arith.constant 32 : index
    %c0_24 = arith.constant 0 : index
    %62 = vector.load %arg10[%c32, %c0_24] : memref<72x256xf32, #tpu.memory_space<vmem>>, vector<8x256xf32>
    tpu.vector_store %arg10[%c32, %c0_24], %37 {strides = array<i32>} : memref<72x256xf32, #tpu.memory_space<vmem>>, vector<8x256xf32>,
    %c255_i32 = arith.constant 255 : i32
    %63 = tpu.dynamic_rotate %37 by %c255_i32 dim 1 : vector<8x256xf32>, i32 -> vector<8x256xf32>
    %cst_25 = arith.constant 0.000000e+00 : f32
    %64 = vector.shape_cast %24 : vector<1x256xi1> to vector<1x256xi1>
    %65 = vector.broadcast %64 : vector<1x256xi1> to vector<8x256xi1>
    %66 = vector.broadcast %cst_25 : f32 to vector<8x256xf32>
    %67 = arith.select %65, %63, %66 : vector<8x256xi1>, vector<8x256xf32>
    %c40 = arith.constant 40 : index
    %c0_26 = arith.constant 0 : index
    %68 = vector.load %arg10[%c40, %c0_26] : memref<72x256xf32, #tpu.memory_space<vmem>>, vector<8x256xf32>
    tpu.vector_store %arg10[%c40, %c0_26], %67 {strides = array<i32>} : memref<72x256xf32, #tpu.memory_space<vmem>>, vector<8x256xf32>,
    %c241_i32 = arith.constant 241 : i32
    %69 = tpu.dynamic_rotate %37 by %c241_i32 dim 1 : vector<8x256xf32>, i32 -> vector<8x256xf32>
    %cst_27 = arith.constant 0.000000e+00 : f32
    %70 = vector.shape_cast %27 : vector<1x256xi1> to vector<1x256xi1>
    %71 = vector.broadcast %70 : vector<1x256xi1> to vector<8x256xi1>
    %72 = vector.broadcast %cst_27 : f32 to vector<8x256xf32>
    %73 = arith.select %71, %69, %72 : vector<8x256xi1>, vector<8x256xf32>
    %c48 = arith.constant 48 : index
    %c0_28 = arith.constant 0 : index
    %74 = vector.load %arg10[%c48, %c0_28] : memref<72x256xf32, #tpu.memory_space<vmem>>, vector<8x256xf32>
    tpu.vector_store %arg10[%c48, %c0_28], %73 {strides = array<i32>} : memref<72x256xf32, #tpu.memory_space<vmem>>, vector<8x256xf32>,
    %c240_i32_29 = arith.constant 240 : i32
    %75 = tpu.dynamic_rotate %37 by %c240_i32_29 dim 1 : vector<8x256xf32>, i32 -> vector<8x256xf32>
    %cst_30 = arith.constant 0.000000e+00 : f32
    %76 = vector.shape_cast %20 : vector<1x256xi1> to vector<1x256xi1>
    %77 = vector.broadcast %76 : vector<1x256xi1> to vector<8x256xi1>
    %78 = vector.broadcast %cst_30 : f32 to vector<8x256xf32>
    %79 = arith.select %77, %75, %78 : vector<8x256xi1>, vector<8x256xf32>
    %c56 = arith.constant 56 : index
    %c0_31 = arith.constant 0 : index
    %80 = vector.load %arg10[%c56, %c0_31] : memref<72x256xf32, #tpu.memory_space<vmem>>, vector<8x256xf32>
    tpu.vector_store %arg10[%c56, %c0_31], %79 {strides = array<i32>} : memref<72x256xf32, #tpu.memory_space<vmem>>, vector<8x256xf32>,
    %c239_i32 = arith.constant 239 : i32
    %81 = tpu.dynamic_rotate %37 by %c239_i32 dim 1 : vector<8x256xf32>, i32 -> vector<8x256xf32>
    %cst_32 = arith.constant 0.000000e+00 : f32
    %82 = vector.shape_cast %28 : vector<1x256xi1> to vector<1x256xi1>
    %83 = vector.broadcast %82 : vector<1x256xi1> to vector<8x256xi1>
    %84 = vector.broadcast %cst_32 : f32 to vector<8x256xf32>
    %85 = arith.select %83, %81, %84 : vector<8x256xi1>, vector<8x256xf32>
    %c64 = arith.constant 64 : index
    %c0_33 = arith.constant 0 : index
    %86 = vector.load %arg10[%c64, %c0_33] : memref<72x256xf32, #tpu.memory_space<vmem>>, vector<8x256xf32>
    tpu.vector_store %arg10[%c64, %c0_33], %85 {strides = array<i32>} : memref<72x256xf32, #tpu.memory_space<vmem>>, vector<8x256xf32>,
    %c0_34 = arith.constant 0 : index
    %c0_35 = arith.constant 0 : index
    %87 = vector.load %arg4[%c0_34, %c0_35] : memref<8x72xbf16, #tpu.memory_space<vmem>>, vector<8x72xbf16>
    %c0_36 = arith.constant 0 : index
    %c0_37 = arith.constant 0 : index
    %88 = vector.load %arg10[%c0_36, %c0_37] : memref<72x256xf32, #tpu.memory_space<vmem>>, vector<72x256xf32>
    %89 = arith.truncf %88 : vector<72x256xf32> to vector<72x256xbf16>
    %cst_38 = arith.constant dense<0.000000e+00> : vector<8x256xf32>
    %90 = tpu.matmul %87, %89, %cst_38 {dimension_numbers = #tpu.dot_dimension_numbers<[1], [0], [0], [1], [0, 0, 1, 1], [], []>} : vector<8x72xbf16>, vector<72x256xbf16>, vector<8x256xf32> -> vector<8x256xf32>
    %c0_39 = arith.constant 0 : index
    %c0_40 = arith.constant 0 : index
    %91 = vector.load %arg5[%c0_39, %c0_40] : memref<8x1xf32, #tpu.memory_space<vmem>>, vector<8x1xf32>
    %92 = vector.broadcast %91 : vector<8x1xf32> to vector<8x256xf32>
    %93 = arith.addf %90, %92 : vector<8x256xf32>
    %cst_41 = arith.constant 0.000000e+00 : f32
    %94 = vector.broadcast %cst_41 : f32 to vector<8x256xf32>
    %95 = arith.maximumf %93, %94 : vector<8x256xf32>
    %c0_42 = arith.constant 0 : index
    %c0_43 = arith.constant 0 : index
    %96 = vector.load %arg6[%c0_42, %c0_43] : memref<32x8xbf16, #tpu.memory_space<vmem>>, vector<32x8xbf16>
    %97 = arith.truncf %95 : vector<8x256xf32> to vector<8x256xbf16>
    %cst_44 = arith.constant dense<0.000000e+00> : vector<32x256xf32>
    %98 = tpu.matmul %96, %97, %cst_44 {dimension_numbers = #tpu.dot_dimension_numbers<[1], [0], [0], [1], [0, 0, 1, 1], [], []>} : vector<32x8xbf16>, vector<8x256xbf16>, vector<32x256xf32> -> vector<32x256xf32>
    %c0_45 = arith.constant 0 : index
    %c0_46 = arith.constant 0 : index
    %99 = vector.load %arg7[%c0_45, %c0_46] : memref<32x16xbf16, #tpu.memory_space<vmem>>, vector<32x16xbf16>
    %cst_47 = arith.constant dense<0.000000e+00> : vector<32x256xf32>
    %100 = tpu.matmul %99, %30, %cst_47 {dimension_numbers = #tpu.dot_dimension_numbers<[1], [0], [0], [1], [0, 0, 1, 1], [], []>} : vector<32x16xbf16>, vector<16x256xbf16>, vector<32x256xf32> -> vector<32x256xf32>
    %101 = arith.addf %98, %100 : vector<32x256xf32>
    %c0_48 = arith.constant 0 : index
    %c0_49 = arith.constant 0 : index
    %102 = vector.load %arg8[%c0_48, %c0_49] : memref<32x1xf32, #tpu.memory_space<vmem>>, vector<32x1xf32>
    %103 = vector.broadcast %102 : vector<32x1xf32> to vector<32x256xf32>
    %104 = arith.addf %101, %103 : vector<32x256xf32>
    %cst_50 = arith.constant 0.000000e+00 : f32
    %105 = vector.broadcast %cst_50 : f32 to vector<32x256xf32>
    %106 = arith.maximumf %104, %105 : vector<32x256xf32>
    %c0_51 = arith.constant 0 : index
    %c0_52 = arith.constant 0 : index
    %c0_53 = arith.constant 0 : index
    %107 = vector.load %arg9[%c0_51, %c0_52, %c0_53] : memref<2x32x256xf32, #tpu.memory_space<vmem>>, vector<1x32x256xf32>
    %108 = vector.shape_cast %107 : vector<1x32x256xf32> to vector<32x256xf32>
    %109 = vector.shape_cast %106 : vector<32x256xf32> to vector<1x32x256xf32>
    tpu.vector_store %arg9[%c0_51, %c0_52, %c0_53], %109 {strides = array<i32>} : memref<2x32x256xf32, #tpu.memory_space<vmem>>, vector<1x32x256xf32>,
    %c1 = arith.constant 1 : index
    %c0_54 = arith.constant 0 : index
    %c0_55 = arith.constant 0 : index
    %110 = vector.load %arg1[%c1, %c0_54, %c0_55] : memref<2x16x256xbf16, #tpu.memory_space<vmem>>, vector<1x16x256xbf16>
    %111 = vector.shape_cast %110 : vector<1x16x256xbf16> to vector<16x256xbf16>
    %c0_56 = arith.constant 0 : index
    %c0_57 = arith.constant 0 : index
    %112 = vector.load %arg2[%c0_56, %c0_57] : memref<8x16xbf16, #tpu.memory_space<vmem>>, vector<8x16xbf16>
    %cst_58 = arith.constant dense<0.000000e+00> : vector<8x256xf32>
    %113 = tpu.matmul %112, %111, %cst_58 {dimension_numbers = #tpu.dot_dimension_numbers<[1], [0], [0], [1], [0, 0, 1, 1], [], []>} : vector<8x16xbf16>, vector<16x256xbf16>, vector<8x256xf32> -> vector<8x256xf32>
    %c0_59 = arith.constant 0 : index
    %c0_60 = arith.constant 0 : index
    %114 = vector.load %arg3[%c0_59, %c0_60] : memref<8x1xf32, #tpu.memory_space<vmem>>, vector<8x1xf32>
    %115 = vector.broadcast %114 : vector<8x1xf32> to vector<8x256xf32>
    %116 = arith.addf %113, %115 : vector<8x256xf32>
    %cst_61 = arith.constant 0.000000e+00 : f32
    %117 = vector.broadcast %cst_61 : f32 to vector<8x256xf32>
    %118 = arith.maximumf %116, %117 : vector<8x256xf32>
    %c17_i32_62 = arith.constant 17 : i32
    %119 = tpu.dynamic_rotate %118 by %c17_i32_62 dim 1 : vector<8x256xf32>, i32 -> vector<8x256xf32>
    %cst_63 = arith.constant 0.000000e+00 : f32
    %120 = vector.shape_cast %25 : vector<1x256xi1> to vector<1x256xi1>
    %121 = vector.broadcast %120 : vector<1x256xi1> to vector<8x256xi1>
    %122 = vector.broadcast %cst_63 : f32 to vector<8x256xf32>
    %123 = arith.select %121, %119, %122 : vector<8x256xi1>, vector<8x256xf32>
    %c0_64 = arith.constant 0 : index
    %c0_65 = arith.constant 0 : index
    %124 = vector.load %arg10[%c0_64, %c0_65] : memref<72x256xf32, #tpu.memory_space<vmem>>, vector<8x256xf32>
    tpu.vector_store %arg10[%c0_64, %c0_65], %123 {strides = array<i32>} : memref<72x256xf32, #tpu.memory_space<vmem>>, vector<8x256xf32>,
    %c16_i32_66 = arith.constant 16 : i32
    %125 = tpu.dynamic_rotate %118 by %c16_i32_66 dim 1 : vector<8x256xf32>, i32 -> vector<8x256xf32>
    %cst_67 = arith.constant 0.000000e+00 : f32
    %126 = vector.shape_cast %18 : vector<1x256xi1> to vector<1x256xi1>
    %127 = vector.broadcast %126 : vector<1x256xi1> to vector<8x256xi1>
    %128 = vector.broadcast %cst_67 : f32 to vector<8x256xf32>
    %129 = arith.select %127, %125, %128 : vector<8x256xi1>, vector<8x256xf32>
    %c8_68 = arith.constant 8 : index
    %c0_69 = arith.constant 0 : index
    %130 = vector.load %arg10[%c8_68, %c0_69] : memref<72x256xf32, #tpu.memory_space<vmem>>, vector<8x256xf32>
    tpu.vector_store %arg10[%c8_68, %c0_69], %129 {strides = array<i32>} : memref<72x256xf32, #tpu.memory_space<vmem>>, vector<8x256xf32>,
    %c15_i32_70 = arith.constant 15 : i32
    %131 = tpu.dynamic_rotate %118 by %c15_i32_70 dim 1 : vector<8x256xf32>, i32 -> vector<8x256xf32>
    %cst_71 = arith.constant 0.000000e+00 : f32
    %132 = vector.shape_cast %26 : vector<1x256xi1> to vector<1x256xi1>
    %133 = vector.broadcast %132 : vector<1x256xi1> to vector<8x256xi1>
    %134 = vector.broadcast %cst_71 : f32 to vector<8x256xf32>
    %135 = arith.select %133, %131, %134 : vector<8x256xi1>, vector<8x256xf32>
    %c16_72 = arith.constant 16 : index
    %c0_73 = arith.constant 0 : index
    %136 = vector.load %arg10[%c16_72, %c0_73] : memref<72x256xf32, #tpu.memory_space<vmem>>, vector<8x256xf32>
    tpu.vector_store %arg10[%c16_72, %c0_73], %135 {strides = array<i32>} : memref<72x256xf32, #tpu.memory_space<vmem>>, vector<8x256xf32>,
    %c1_i32_74 = arith.constant 1 : i32
    %137 = tpu.dynamic_rotate %118 by %c1_i32_74 dim 1 : vector<8x256xf32>, i32 -> vector<8x256xf32>
    %cst_75 = arith.constant 0.000000e+00 : f32
    %138 = vector.shape_cast %22 : vector<1x256xi1> to vector<1x256xi1>
    %139 = vector.broadcast %138 : vector<1x256xi1> to vector<8x256xi1>
    %140 = vector.broadcast %cst_75 : f32 to vector<8x256xf32>
    %141 = arith.select %139, %137, %140 : vector<8x256xi1>, vector<8x256xf32>
    %c24_76 = arith.constant 24 : index
    %c0_77 = arith.constant 0 : index
    %142 = vector.load %arg10[%c24_76, %c0_77] : memref<72x256xf32, #tpu.memory_space<vmem>>, vector<8x256xf32>
    tpu.vector_store %arg10[%c24_76, %c0_77], %141 {strides = array<i32>} : memref<72x256xf32, #tpu.memory_space<vmem>>, vector<8x256xf32>,
    %c32_78 = arith.constant 32 : index
    %c0_79 = arith.constant 0 : index
    %143 = vector.load %arg10[%c32_78, %c0_79] : memref<72x256xf32, #tpu.memory_space<vmem>>, vector<8x256xf32>
    tpu.vector_store %arg10[%c32_78, %c0_79], %118 {strides = array<i32>} : memref<72x256xf32, #tpu.memory_space<vmem>>, vector<8x256xf32>,
    %c255_i32_80 = arith.constant 255 : i32
    %144 = tpu.dynamic_rotate %118 by %c255_i32_80 dim 1 : vector<8x256xf32>, i32 -> vector<8x256xf32>
    %cst_81 = arith.constant 0.000000e+00 : f32
    %145 = vector.shape_cast %24 : vector<1x256xi1> to vector<1x256xi1>
    %146 = vector.broadcast %145 : vector<1x256xi1> to vector<8x256xi1>
    %147 = vector.broadcast %cst_81 : f32 to vector<8x256xf32>
    %148 = arith.select %146, %144, %147 : vector<8x256xi1>, vector<8x256xf32>
    %c40_82 = arith.constant 40 : index
    %c0_83 = arith.constant 0 : index
    %149 = vector.load %arg10[%c40_82, %c0_83] : memref<72x256xf32, #tpu.memory_space<vmem>>, vector<8x256xf32>
    tpu.vector_store %arg10[%c40_82, %c0_83], %148 {strides = array<i32>} : memref<72x256xf32, #tpu.memory_space<vmem>>, vector<8x256xf32>,
    %c241_i32_84 = arith.constant 241 : i32
    %150 = tpu.dynamic_rotate %118 by %c241_i32_84 dim 1 : vector<8x256xf32>, i32 -> vector<8x256xf32>
    %cst_85 = arith.constant 0.000000e+00 : f32
    %151 = vector.shape_cast %27 : vector<1x256xi1> to vector<1x256xi1>
    %152 = vector.broadcast %151 : vector<1x256xi1> to vector<8x256xi1>
    %153 = vector.broadcast %cst_85 : f32 to vector<8x256xf32>
    %154 = arith.select %152, %150, %153 : vector<8x256xi1>, vector<8x256xf32>
    %c48_86 = arith.constant 48 : index
    %c0_87 = arith.constant 0 : index
    %155 = vector.load %arg10[%c48_86, %c0_87] : memref<72x256xf32, #tpu.memory_space<vmem>>, vector<8x256xf32>
    tpu.vector_store %arg10[%c48_86, %c0_87], %154 {strides = array<i32>} : memref<72x256xf32, #tpu.memory_space<vmem>>, vector<8x256xf32>,
    %c240_i32_88 = arith.constant 240 : i32
    %156 = tpu.dynamic_rotate %118 by %c240_i32_88 dim 1 : vector<8x256xf32>, i32 -> vector<8x256xf32>
    %cst_89 = arith.constant 0.000000e+00 : f32
    %157 = vector.shape_cast %20 : vector<1x256xi1> to vector<1x256xi1>
    %158 = vector.broadcast %157 : vector<1x256xi1> to vector<8x256xi1>
    %159 = vector.broadcast %cst_89 : f32 to vector<8x256xf32>
    %160 = arith.select %158, %156, %159 : vector<8x256xi1>, vector<8x256xf32>
    %c56_90 = arith.constant 56 : index
    %c0_91 = arith.constant 0 : index
    %161 = vector.load %arg10[%c56_90, %c0_91] : memref<72x256xf32, #tpu.memory_space<vmem>>, vector<8x256xf32>
    tpu.vector_store %arg10[%c56_90, %c0_91], %160 {strides = array<i32>} : memref<72x256xf32, #tpu.memory_space<vmem>>, vector<8x256xf32>,
    %c239_i32_92 = arith.constant 239 : i32
    %162 = tpu.dynamic_rotate %118 by %c239_i32_92 dim 1 : vector<8x256xf32>, i32 -> vector<8x256xf32>
    %cst_93 = arith.constant 0.000000e+00 : f32
    %163 = vector.shape_cast %28 : vector<1x256xi1> to vector<1x256xi1>
    %164 = vector.broadcast %163 : vector<1x256xi1> to vector<8x256xi1>
    %165 = vector.broadcast %cst_93 : f32 to vector<8x256xf32>
    %166 = arith.select %164, %162, %165 : vector<8x256xi1>, vector<8x256xf32>
    %c64_94 = arith.constant 64 : index
    %c0_95 = arith.constant 0 : index
    %167 = vector.load %arg10[%c64_94, %c0_95] : memref<72x256xf32, #tpu.memory_space<vmem>>, vector<8x256xf32>
    tpu.vector_store %arg10[%c64_94, %c0_95], %166 {strides = array<i32>} : memref<72x256xf32, #tpu.memory_space<vmem>>, vector<8x256xf32>,
    %c0_96 = arith.constant 0 : index
    %c0_97 = arith.constant 0 : index
    %168 = vector.load %arg4[%c0_96, %c0_97] : memref<8x72xbf16, #tpu.memory_space<vmem>>, vector<8x72xbf16>
    %c0_98 = arith.constant 0 : index
    %c0_99 = arith.constant 0 : index
    %169 = vector.load %arg10[%c0_98, %c0_99] : memref<72x256xf32, #tpu.memory_space<vmem>>, vector<72x256xf32>
    %170 = arith.truncf %169 : vector<72x256xf32> to vector<72x256xbf16>
    %cst_100 = arith.constant dense<0.000000e+00> : vector<8x256xf32>
    %171 = tpu.matmul %168, %170, %cst_100 {dimension_numbers = #tpu.dot_dimension_numbers<[1], [0], [0], [1], [0, 0, 1, 1], [], []>} : vector<8x72xbf16>, vector<72x256xbf16>, vector<8x256xf32> -> vector<8x256xf32>
    %c0_101 = arith.constant 0 : index
    %c0_102 = arith.constant 0 : index
    %172 = vector.load %arg5[%c0_101, %c0_102] : memref<8x1xf32, #tpu.memory_space<vmem>>, vector<8x1xf32>
    %173 = vector.broadcast %172 : vector<8x1xf32> to vector<8x256xf32>
    %174 = arith.addf %171, %173 : vector<8x256xf32>
    %cst_103 = arith.constant 0.000000e+00 : f32
    %175 = vector.broadcast %cst_103 : f32 to vector<8x256xf32>
    %176 = arith.maximumf %174, %175 : vector<8x256xf32>
    %c0_104 = arith.constant 0 : index
    %c0_105 = arith.constant 0 : index
    %177 = vector.load %arg6[%c0_104, %c0_105] : memref<32x8xbf16, #tpu.memory_space<vmem>>, vector<32x8xbf16>
    %178 = arith.truncf %176 : vector<8x256xf32> to vector<8x256xbf16>
    %cst_106 = arith.constant dense<0.000000e+00> : vector<32x256xf32>
    %179 = tpu.matmul %177, %178, %cst_106 {dimension_numbers = #tpu.dot_dimension_numbers<[1], [0], [0], [1], [0, 0, 1, 1], [], []>} : vector<32x8xbf16>, vector<8x256xbf16>, vector<32x256xf32> -> vector<32x256xf32>
    %c0_107 = arith.constant 0 : index
    %c0_108 = arith.constant 0 : index
    %180 = vector.load %arg7[%c0_107, %c0_108] : memref<32x16xbf16, #tpu.memory_space<vmem>>, vector<32x16xbf16>
    %cst_109 = arith.constant dense<0.000000e+00> : vector<32x256xf32>
    %181 = tpu.matmul %180, %111, %cst_109 {dimension_numbers = #tpu.dot_dimension_numbers<[1], [0], [0], [1], [0, 0, 1, 1], [], []>} : vector<32x16xbf16>, vector<16x256xbf16>, vector<32x256xf32> -> vector<32x256xf32>
    %182 = arith.addf %179, %181 : vector<32x256xf32>
    %c0_110 = arith.constant 0 : index
    %c0_111 = arith.constant 0 : index
    %183 = vector.load %arg8[%c0_110, %c0_111] : memref<32x1xf32, #tpu.memory_space<vmem>>, vector<32x1xf32>
    %184 = vector.broadcast %183 : vector<32x1xf32> to vector<32x256xf32>
    %185 = arith.addf %182, %184 : vector<32x256xf32>
    %cst_112 = arith.constant 0.000000e+00 : f32
    %186 = vector.broadcast %cst_112 : f32 to vector<32x256xf32>
    %187 = arith.maximumf %185, %186 : vector<32x256xf32>
    %c1_113 = arith.constant 1 : index
    %c0_114 = arith.constant 0 : index
    %c0_115 = arith.constant 0 : index
    %188 = vector.load %arg9[%c1_113, %c0_114, %c0_115] : memref<2x32x256xf32, #tpu.memory_space<vmem>>, vector<1x32x256xf32>
    %189 = vector.shape_cast %188 : vector<1x32x256xf32> to vector<32x256xf32>
    %190 = vector.shape_cast %187 : vector<32x256xf32> to vector<1x32x256xf32>
    tpu.vector_store %arg9[%c1_113, %c0_114, %c0_115], %190 {strides = array<i32>} : memref<2x32x256xf32, #tpu.memory_space<vmem>>, vector<1x32x256xf32>,
    return
  }
  func.func @transform_0(%arg0: i32) -> (i32, i32, i32) {
    %c0_i32 = arith.constant 0 : i32
    %c0_i32_0 = arith.constant 0 : i32
    %c0_i32_1 = arith.constant 0 : i32
    return %arg0, %c0_i32, %c0_i32_0 : i32, i32, i32
  }
  func.func @transform_1(%arg0: i32) -> (i32, i32) {
    %c0_i32 = arith.constant 0 : i32
    %c0_i32_0 = arith.constant 0 : i32
    %c0_i32_1 = arith.constant 0 : i32
    return %c0_i32, %c0_i32_0 : i32, i32
  }
  func.func @transform_2(%arg0: i32) -> (i32, i32) {
    %c0_i32 = arith.constant 0 : i32
    %c0_i32_0 = arith.constant 0 : i32
    %c0_i32_1 = arith.constant 0 : i32
    return %c0_i32, %c0_i32_0 : i32, i32
  }
  func.func @transform_3(%arg0: i32) -> (i32, i32) {
    %c0_i32 = arith.constant 0 : i32
    %c0_i32_0 = arith.constant 0 : i32
    %c0_i32_1 = arith.constant 0 : i32
    return %c0_i32, %c0_i32_0 : i32, i32
  }
  func.func @transform_4(%arg0: i32) -> (i32, i32) {
    %c0_i32 = arith.constant 0 : i32
    %c0_i32_0 = arith.constant 0 : i32
    %c0_i32_1 = arith.constant 0 : i32
    return %c0_i32, %c0_i32_0 : i32, i32
  }
  func.func @transform_5(%arg0: i32) -> (i32, i32) {
    %c0_i32 = arith.constant 0 : i32
    %c0_i32_0 = arith.constant 0 : i32
    %c0_i32_1 = arith.constant 0 : i32
    return %c0_i32, %c0_i32_0 : i32, i32
  }
  func.func @transform_6(%arg0: i32) -> (i32, i32) {
    %c0_i32 = arith.constant 0 : i32
    %c0_i32_0 = arith.constant 0 : i32
    %c0_i32_1 = arith.constant 0 : i32
    return %c0_i32, %c0_i32_0 : i32, i32
  }
  func.func @transform_7(%arg0: i32) -> (i32, i32) {
    %c0_i32 = arith.constant 0 : i32
    %c0_i32_0 = arith.constant 0 : i32
    %c0_i32_1 = arith.constant 0 : i32
    return %c0_i32, %c0_i32_0 : i32, i32
  }
  func.func @transform_8(%arg0: i32) -> (i32, i32, i32) {
    %c0_i32 = arith.constant 0 : i32
    %c0_i32_0 = arith.constant 0 : i32
    %c0_i32_1 = arith.constant 0 : i32
    return %arg0, %c0_i32, %c0_i32_0 : i32, i32, i32
  }
}

</mosaic_0001>

<llo_original>
// kernel: tpu_custom_call.1
$region0: #{tpu_custom_call.1}
  #allocation0 [shape = 'u32[]', space=smem, size = 0x4, offset = 0x4, fixed_abs, tag = 'smem constant byte address 0x4 - core index']
  #allocation1 [shape = 'u32[144,128]{1,0:T(1,128)}', space=vmem, size = 0x12000, scoped, tag = 'internal scratch']
  #allocation2 [shape = 'f32[72,256]{1,0:T(8,128)}', space=vmem, size = 0x12000, scoped, tag = 'scratch operand']
  %s0 = inlined_call_operand.vmem [shape: bf16[2,16,256], index: 0, kind: input, shape index: {}]
  %s1 = inlined_call_operand.vmem [shape: bf16[8,16], index: 1, kind: input, shape index: {}]
  %s2 = inlined_call_operand.vmem [shape: f32[8,1], index: 2, kind: input, shape index: {}]
  %s3 = inlined_call_operand.vmem [shape: bf16[8,72], index: 3, kind: input, shape index: {}]
  %s4 = inlined_call_operand.vmem [shape: f32[8,1], index: 4, kind: input, shape index: {}]
  %s5 = inlined_call_operand.vmem [shape: bf16[32,8], index: 5, kind: input, shape index: {}]
  %s6 = inlined_call_operand.vmem [shape: bf16[32,16], index: 6, kind: input, shape index: {}]
  %s7 = inlined_call_operand.vmem [shape: f32[32,1], index: 7, kind: input, shape index: {}]
  %s8 = inlined_call_operand.hbm [shape: f32[2,32,256], index: 8, kind: output, shape index: {}]
  %s9 = sld [smem:[#allocation0]]
  $region42: #{tpu_custom_call.1} parent=0
    _
  %s11 = ssub.s32 1, %s9
  %s12 = scalar_select 0, %s11, %s9
  $region1: #{tpu_custom_call.1} parent=0
    #allocation3 [shape = 'u8[65536]{0}', space=vmem, size = 0x10000, scoped, tag = 'output window, operand 0, single buffered']
    #allocation4 [shape = 's32[1]{0}', space=sflag, size = 0x4, scoped, tag = 'scoped memory for tpu_custom_call.1']
    %13 = vsyncpa [#allocation4], 0
    // Predicated region
    $region2: #{tpu_custom_call.1} parent=1 // pred_check
      _
    $region3: #{tpu_custom_call.1} parent=1 // pred_check_branch
      %15 = sbr.rel (0) target = $region5
    $region4: #{tpu_custom_call.1} parent=1 // pred_region
      _
    $region5: #{tpu_custom_call.1} parent=1 // pred_fallthru
      _
    // Predicated region
    $region6: #{tpu_custom_call.1} parent=1 // pred_check
      _
    $region7: #{tpu_custom_call.1} parent=1 // pred_check_branch
      %17 = sbr.rel (0) target = $region9
    $region8: #{tpu_custom_call.1} parent=1 // pred_region
      _
    $region9: #{tpu_custom_call.1} parent=1 // pred_fallthru
      _
    // Predicated region
    $region10: #{tpu_custom_call.1} parent=1 // pred_check
      _
    $region11: #{tpu_custom_call.1} parent=1 // pred_check_branch
      %19 = sbr.rel (0) target = $region13
    $region12: #{tpu_custom_call.1} parent=1 // pred_region
      _
    $region13: #{tpu_custom_call.1} parent=1 // pred_fallthru
      _
    // Predicated region
    $region14: #{tpu_custom_call.1} parent=1 // pred_check
      _
    $region15: #{tpu_custom_call.1} parent=1 // pred_check_branch
      %21 = sbr.rel (0) target = $region17
    $region16: #{tpu_custom_call.1} parent=1 // pred_region
      _
    $region17: #{tpu_custom_call.1} parent=1 // pred_fallthru
      _
    // Predicated region
    $region18: #{tpu_custom_call.1} parent=1 // pred_check
      _
    $region19: #{tpu_custom_call.1} parent=1 // pred_check_branch
      %23 = sbr.rel (0) target = $region21
    $region20: #{tpu_custom_call.1} parent=1 // pred_region
      _
    $region21: #{tpu_custom_call.1} parent=1 // pred_fallthru
      _
    // Predicated region
    $region22: #{tpu_custom_call.1} parent=1 // pred_check
      _
    $region23: #{tpu_custom_call.1} parent=1 // pred_check_branch
      %25 = sbr.rel (0) target = $region25
    $region24: #{tpu_custom_call.1} parent=1 // pred_region
      _
    $region25: #{tpu_custom_call.1} parent=1 // pred_fallthru
      _
    // Predicated region
    $region26: #{tpu_custom_call.1} parent=1 // pred_check
      _
    $region27: #{tpu_custom_call.1} parent=1 // pred_check_branch
      %27 = sbr.rel (0) target = $region29
    $region28: #{tpu_custom_call.1} parent=1 // pred_region
      _
    $region29: #{tpu_custom_call.1} parent=1 // pred_fallthru
      _
    // Predicated region
    $region30: #{tpu_custom_call.1} parent=1 // pred_check
      _
    $region31: #{tpu_custom_call.1} parent=1 // pred_check_branch
      %29 = sbr.rel (0) target = $region33
    $region32: #{tpu_custom_call.1} parent=1 // pred_region
      _
    $region33: #{tpu_custom_call.1} parent=1 // pred_fallthru
      _
    %v31 = vlaneseq
    %v32 = vand.u32 %v31, 127
    %v33 = vadd.s32 %v32, 128
    %vm34 = vcmp.lt.s32.totalorder %v32, 0
    %v35 = vsub.s32 0, %v32
    %v36 = vsel %vm34, %v35, %v32
    %v37 = vshrl.u32 %v36, 4
    %v38 = vand.u32 %v36, 15
    %v39 = vsub.s32 0, %v38
    %v40 = vsel %vm34, %v39, %v38
    %vm41 = vcmp.lt.s32.totalorder %v33, 0
    %v42 = vsub.s32 0, %v33
    %v43 = vsel %vm41, %v42, %v33
    %v44 = vshrl.u32 %v43, 4
    %v45 = vand.u32 %v43, 15
    %v46 = vsub.s32 0, %v45
    %v47 = vsel %vm41, %v46, %v45
    %vm48 = vcmp.ne.s32.totalorder %v40, 0
    %vm49 = vcmp.ne.s32.totalorder %v47, 0
    %vm50 = vcmp.lt.s32.totalorder %v40, 0
    %vm51 = vcmp.lt.s32.totalorder %v47, 0
    %vm52 = vmand %vm50, %vm48
    %vm53 = vmand %vm51, %vm49
    %v54 = vadd.s32 %v40, 16
    %v55 = vadd.s32 %v47, 16
    %v56 = vsel %vm52, %v54, %v40
    %v57 = vsel %vm53, %v55, %v47
    %vm58 = vcmp.ge.s32.totalorder %v32, 16
    %vm59 = vcmp.ge.s32.totalorder %v33, 16
    %vm60 = vcmp.lt.s32.totalorder %v32, 240
    %vm61 = vcmp.lt.s32.totalorder %v33, 240
    %vm62 = vcmp.gt.s32.totalorder %v56, 0
    %vm63 = vcmp.gt.s32.totalorder %v57, 0
    %vm64 = vcmp.lt.s32.totalorder %v56, 15
    %vm65 = vcmp.lt.s32.totalorder %v57, 15
    %vm66 = vmand %vm58, %vm62
    %vm67 = vmand %vm59, %vm63
    %vm68 = vmand %vm58, %vm64
    %vm69 = vmand %vm59, %vm65
    %vm70 = vmand %vm60, %vm62
    %vm71 = vmand %vm61, %vm63
    %vm72 = vmand %vm60, %vm64
    %vm73 = vmand %vm61, %vm65
    %v74 = vld [vmem:[%s0] sm:$0xff]
    %v75 = vld [vmem:[%s0 + $0x8] sm:$0xff]
    %v76 = vld [vmem:[%s1] sm:$0xf]
    %v77 = vld [vmem:[%s2] sm:$0xff]
    %79 = vset.pattern.permute.xlu0 0
    %80 = vperm.xlu0 %79, %v77
    %v81 = vpop.permute.xlu0 %80
    %v85 = vunpack.c.l.b16 %v74
    %v86 = vunpack.c.h.b16 %v74
    %v87 = vunpack.c.l.b16 %v75
    %v88 = vunpack.c.h.b16 %v75
    %v89 = vpack.c.b16 %v87, %v85
    %v90 = vpack.c.b16 %v88, %v86
    %vm93 = vcmask 130048
    %v95 = vsel %vm93, %v76, 0
    %97 = vmatprep.subr.bf16.mxu0 0
    %98 = vmatpush1.bf16.msra.mxu0 0
    %99 = vmatprep.subr.bf16.mxu0 0
    %100 = vmatpush1.bf16.msra.mxu0 0
    %101 = vmatprep.subr.bf16.mxu0 0
    %102 = vmatpush1.bf16.msra.mxu0 0
    %103 = vmatprep.subr.bf16.mxu0 0
    %104 = vmatpush1.bf16.msra.mxu0 0
    %105 = vmatprep.subr.bf16.mxu0 0
    %106 = vmatpush1.bf16.msra.mxu0 0
    %107 = vmatprep.subr.bf16.mxu0 0
    %108 = vmatpush1.bf16.msra.mxu0 0
    %109 = vmatprep.subr.bf16.mxu0 0
    %110 = vmatpush1.bf16.msra.mxu0 0
    %111 = vmatprep.subr.bf16.mxu0 %v90
    %112 = vmatpush1.bf16.msra.mxu0 %v89
    %113 = vmatprep.subr.bf16.mxu0 0
    %114 = vmatpush2.bf16.msra.mxu0 0
    %115 = vmatprep.subr.bf16.mxu0 0
    %116 = vmatpush2.bf16.msra.mxu0 0
    %117 = vmatprep.subr.bf16.mxu0 0
    %118 = vmatpush2.bf16.msra.mxu0 0
    %119 = vmatprep.subr.bf16.mxu0 0
    %120 = vmatpush2.bf16.msra.mxu0 0
    %121 = vmatprep.subr.bf16.mxu0 0
    %122 = vmatpush2.bf16.msra.mxu0 0
    %123 = vmatprep.subr.bf16.mxu0 0
    %124 = vmatpush2.bf16.msra.mxu0 0
    %125 = vmatprep.subr.bf16.mxu0 0
    %126 = vmatpush2.bf16.msra.mxu0 0
    %127 = vmatprep.subr.bf16.mxu0 0
    %128 = vmatpush2.bf16.msra.mxu0 0
    %129 = vmatprep.mubr.bf16.mxu0 0
    %130 = vmatmul.mubr.bf16.gmra.mxu0 %v95
    %v131 = vpop.f32.mrf.mxu0
    %v132 = vadd.f32 %v81, %v131
    %v133 = vpop.f32.mrf.mxu0
    %v134 = vadd.f32 %v81, %v133
    %v135 = vpop.f32.mrf.mxu0
    %v136 = vpop.f32.mrf.mxu0
    %137 = vdwg.mxu0
    %v138 = vmax.f32 %v132, 0.0
    %v139 = vmax.f32 %v134, 0.0
    %140 = vrot.lane.b32.xlu0 %v138, 17
    %v141 = vpop.permute.xlu0 %140
    %142 = vrot.lane.b32.xlu0 %v139, 17
    %v143 = vpop.permute.xlu0 %142
    %vm144 = vcmp.lt.s32.totalorder %v32, 17
    %v145 = vsel %vm144, %v141, %v143
    %v146 = vsel %vm144, %v143, %v141
    %v147 = vsel %vm66, 1, 0
    %v148 = vsel %vm67, 1, 0
    %vm149 = vcmp.eq.s32.totalorder %v147, 1
    %vm150 = vcmp.eq.s32.totalorder %v148, 1
    %v151 = vsel %vm149, %v146, 0.0
    %v152 = vsel %vm150, %v145, 0.0
    %153 = vst [vmem:[#allocation2] sm:$0xff] %v151
    %154 = vst [vmem:[#allocation2 + $0x8] sm:$0xff] %v152
    %155 = vrot.lane.b32.xlu0 %v138, 16
    %v156 = vpop.permute.xlu0 %155
    %157 = vrot.lane.b32.xlu0 %v139, 16
    %v158 = vpop.permute.xlu0 %157
    %vm159 = vcmp.lt.s32.totalorder %v32, 16
    %v160 = vsel %vm159, %v156, %v158
    %v161 = vsel %vm159, %v158, %v156
    %v162 = vsel %vm58, 1, 0
    %v163 = vsel %vm59, 1, 0
    %vm164 = vcmp.eq.s32.totalorder %v162, 1
    %vm165 = vcmp.eq.s32.totalorder %v163, 1
    %v166 = vsel %vm164, %v161, 0.0
    %v167 = vsel %vm165, %v160, 0.0
    %168 = vst [vmem:[#allocation2 + $0x10] sm:$0xff] %v166
    %169 = vst [vmem:[#allocation2 + $0x18] sm:$0xff] %v167
    %170 = vrot.lane.b32.xlu0 %v138, 15
    %v171 = vpop.permute.xlu0 %170
    %172 = vrot.lane.b32.xlu0 %v139, 15
    %v173 = vpop.permute.xlu0 %172
    %vm174 = vcmp.lt.s32.totalorder %v32, 15
    %v175 = vsel %vm174, %v171, %v173
    %v176 = vsel %vm174, %v173, %v171
    %v177 = vsel %vm68, 1, 0
    %v178 = vsel %vm69, 1, 0
    %vm179 = vcmp.eq.s32.totalorder %v177, 1
    %vm180 = vcmp.eq.s32.totalorder %v178, 1
    %v181 = vsel %vm179, %v176, 0.0
    %v182 = vsel %vm180, %v175, 0.0
    %183 = vst [vmem:[#allocation2 + $0x20] sm:$0xff] %v181
    %184 = vst [vmem:[#allocation2 + $0x28] sm:$0xff] %v182
    %185 = vrot.lane.b32.xlu0 %v138, 1
    %v186 = vpop.permute.xlu0 %185
    %187 = vrot.lane.b32.xlu0 %v139, 1
    %v188 = vpop.permute.xlu0 %187
    %vm189 = vcmp.lt.s32.totalorder %v32, 1
    %v190 = vsel %vm189, %v186, %v188
    %v191 = vsel %vm189, %v188, %v186
    %v192 = vsel %vm62, 1, 0
    %v193 = vsel %vm63, 1, 0
    %vm194 = vcmp.eq.s32.totalorder %v192, 1
    %vm195 = vcmp.eq.s32.totalorder %v193, 1
    %v196 = vsel %vm194, %v191, 0.0
    %v197 = vsel %vm195, %v190, 0.0
    %198 = vst [vmem:[#allocation2 + $0x30] sm:$0xff] %v196
    %199 = vst [vmem:[#allocation2 + $0x38] sm:$0xff] %v197
    %200 = vst [vmem:[#allocation2 + $0x40] sm:$0xff] %v138
    %201 = vst [vmem:[#allocation2 + $0x48] sm:$0xff] %v139
    %202 = vrot.lane.b32.xlu0 %v138, 127
    %v203 = vpop.permute.xlu0 %202
    %204 = vrot.lane.b32.xlu0 %v139, 127
    %v205 = vpop.permute.xlu0 %204
    %vm206 = vcmp.lt.s32.totalorder %v32, 127
    %v207 = vsel %vm206, %v203, %v205
    %v208 = vsel %vm206, %v205, %v203
    %v209 = vsel %vm64, 1, 0
    %v210 = vsel %vm65, 1, 0
    %vm211 = vcmp.eq.s32.totalorder %v209, 1
    %vm212 = vcmp.eq.s32.totalorder %v210, 1
    %v213 = vsel %vm211, %v207, 0.0
    %v214 = vsel %vm212, %v208, 0.0
    %215 = vst [vmem:[#allocation2 + $0x50] sm:$0xff] %v213
    %216 = vst [vmem:[#allocation2 + $0x58] sm:$0xff] %v214
    %217 = vrot.lane.b32.xlu0 %v138, 113
    %v218 = vpop.permute.xlu0 %217
    %219 = vrot.lane.b32.xlu0 %v139, 113
    %v220 = vpop.permute.xlu0 %219
    %vm221 = vcmp.lt.s32.totalorder %v32, 113
    %v222 = vsel %vm221, %v218, %v220
    %v223 = vsel %vm221, %v220, %v218
    %v224 = vsel %vm70, 1, 0
    %v225 = vsel %vm71, 1, 0
    %vm226 = vcmp.eq.s32.totalorder %v224, 1
    %vm227 = vcmp.eq.s32.totalorder %v225, 1
    %v228 = vsel %vm226, %v222, 0.0
    %v229 = vsel %vm227, %v223, 0.0
    %230 = vst [vmem:[#allocation2 + $0x60] sm:$0xff] %v228
    %231 = vst [vmem:[#allocation2 + $0x68] sm:$0xff] %v229
    %232 = vrot.lane.b32.xlu0 %v138, 112
    %v233 = vpop.permute.xlu0 %232
    %234 = vrot.lane.b32.xlu0 %v139, 112
    %v235 = vpop.permute.xlu0 %234
    %vm236 = vcmp.lt.s32.totalorder %v32, 112
    %v237 = vsel %vm236, %v233, %v235
    %v238 = vsel %vm236, %v235, %v233
    %v239 = vsel %vm60, 1, 0
    %v240 = vsel %vm61, 1, 0
    %vm241 = vcmp.eq.s32.totalorder %v239, 1
    %vm242 = vcmp.eq.s32.totalorder %v240, 1
    %v243 = vsel %vm241, %v237, 0.0
    %v244 = vsel %vm242, %v238, 0.0
    %245 = vst [vmem:[#allocation2 + $0x70] sm:$0xff] %v243
    %246 = vst [vmem:[#allocation2 + $0x78] sm:$0xff] %v244
    %247 = vrot.lane.b32.xlu0 %v138, 111
    %v248 = vpop.permute.xlu0 %247
    %249 = vrot.lane.b32.xlu0 %v139, 111
    %v250 = vpop.permute.xlu0 %249
    %vm251 = vcmp.lt.s32.totalorder %v32, 111
    %v252 = vsel %vm251, %v248, %v250
    %v253 = vsel %vm251, %v250, %v248
    %v254 = vsel %vm72, 1, 0
    %v255 = vsel %vm73, 1, 0
    %vm256 = vcmp.eq.s32.totalorder %v254, 1
    %vm257 = vcmp.eq.s32.totalorder %v255, 1
    %v258 = vsel %vm256, %v252, 0.0
    %v259 = vsel %vm257, %v253, 0.0
    %260 = vst [vmem:[#allocation2 + $0x80] sm:$0xff] %v258
    %261 = vst [vmem:[#allocation2 + $0x88] sm:$0xff] %v259
    %v262 = vld [vmem:[%s3] sm:$0xf]
    %v263 = vld [vmem:[#allocation2] sm:$0xff]
    %v264 = vld [vmem:[#allocation2 + $0x8] sm:$0xff]
    %v265 = vld [vmem:[#allocation2 + $0x10] sm:$0xff]
    %v266 = vld [vmem:[#allocation2 + $0x18] sm:$0xff]
    %v267 = vld [vmem:[#allocation2 + $0x20] sm:$0xff]
    %v268 = vld [vmem:[#allocation2 + $0x28] sm:$0xff]
    %v269 = vld [vmem:[#allocation2 + $0x30] sm:$0xff]
    %v270 = vld [vmem:[#allocation2 + $0x38] sm:$0xff]
    %v271 = vld [vmem:[#allocation2 + $0x40] sm:$0xff]
    %v272 = vld [vmem:[#allocation2 + $0x48] sm:$0xff]
    %v273 = vld [vmem:[#allocation2 + $0x50] sm:$0xff]
    %v274 = vld [vmem:[#allocation2 + $0x58] sm:$0xff]
    %v275 = vld [vmem:[#allocation2 + $0x60] sm:$0xff]
    %v276 = vld [vmem:[#allocation2 + $0x68] sm:$0xff]
    %v277 = vld [vmem:[#allocation2 + $0x70] sm:$0xff]
    %v278 = vld [vmem:[#allocation2 + $0x78] sm:$0xff]
    %v279 = vld [vmem:[#allocation2 + $0x80] sm:$0xff]
    %v280 = vld [vmem:[#allocation2 + $0x88] sm:$0xff]
    %v281 = vpack.c.bf16 %v265, %v263
    %v282 = vpack.c.bf16 %v266, %v264
    %v283 = vpack.c.bf16 %v269, %v267
    %v284 = vpack.c.bf16 %v270, %v268
    %v285 = vpack.c.bf16 %v273, %v271
    %v286 = vpack.c.bf16 %v274, %v272
    %v287 = vpack.c.bf16 %v277, %v275
    %v288 = vpack.c.bf16 %v278, %v276
    %v289 = vpack.c.bf16 %v279, %v279
    %v290 = vpack.c.bf16 %v280, %v280
    %v291 = vld [vmem:[%s4] sm:$0xff]
    %293 = vset.pattern.permute.xlu0 0
    %294 = vperm.xlu0 %293, %v291
    %v295 = vpop.permute.xlu0 %294
    %vm297 = vcmask 588800
    %v299 = vsel %vm297, %v262, 0
    %vm301 = vcmask 1043456
    %v303 = vsel %vm301, %v289, 0
    %v306 = vsel %vm301, %v290, 0
    %308 = vmatprep.subr.bf16.mxu0 0
    %309 = vmatpush1.bf16.msra.mxu0 0
    %310 = vmatprep.subr.bf16.mxu0 0
    %311 = vmatpush1.bf16.msra.mxu0 0
    %312 = vmatprep.subr.bf16.mxu0 0
    %313 = vmatpush1.bf16.msra.mxu0 0
    %314 = vmatprep.subr.bf16.mxu0 %v306
    %315 = vmatpush1.bf16.msra.mxu0 %v303
    %316 = vmatprep.subr.bf16.mxu0 %v288
    %317 = vmatpush1.bf16.msra.mxu0 %v287
    %318 = vmatprep.subr.bf16.mxu0 %v286
    %319 = vmatpush1.bf16.msra.mxu0 %v285
    %320 = vmatprep.subr.bf16.mxu0 %v284
    %321 = vmatpush1.bf16.msra.mxu0 %v283
    %322 = vmatprep.subr.bf16.mxu0 %v282
    %323 = vmatpush1.bf16.msra.mxu0 %v281
    %324 = vmatprep.subr.bf16.mxu0 0
    %325 = vmatpush2.bf16.msra.mxu0 0
    %326 = vmatprep.subr.bf16.mxu0 0
    %327 = vmatpush2.bf16.msra.mxu0 0
    %328 = vmatprep.subr.bf16.mxu0 0
    %329 = vmatpush2.bf16.msra.mxu0 0
    %330 = vmatprep.subr.bf16.mxu0 0
    %331 = vmatpush2.bf16.msra.mxu0 0
    %332 = vmatprep.subr.bf16.mxu0 0
    %333 = vmatpush2.bf16.msra.mxu0 0
    %334 = vmatprep.subr.bf16.mxu0 0
    %335 = vmatpush2.bf16.msra.mxu0 0
    %336 = vmatprep.subr.bf16.mxu0 0
    %337 = vmatpush2.bf16.msra.mxu0 0
    %338 = vmatprep.subr.bf16.mxu0 0
    %339 = vmatpush2.bf16.msra.mxu0 0
    %340 = vmatprep.mubr.bf16.mxu0 0
    %341 = vmatmul.mubr.bf16.gmra.mxu0 %v299
    %v342 = vpop.f32.mrf.mxu0
    %v343 = vadd.f32 %v295, %v342
    %v344 = vpop.f32.mrf.mxu0
    %v345 = vadd.f32 %v295, %v344
    %v346 = vpop.f32.mrf.mxu0
    %v347 = vpop.f32.mrf.mxu0
    %348 = vdwg.mxu0
    %v349 = vmax.f32 %v343, 0.0
    %v350 = vmax.f32 %v345, 0.0
    %v351 = vld [vmem:[%s5] sm:$0xf]
    %v352 = vld [vmem:[%s5 + $0x4] sm:$0xf]
    %v353 = vld [vmem:[%s5 + $0x8] sm:$0xf]
    %v354 = vld [vmem:[%s5 + $0xc] sm:$0xf]
    %v355 = vpack.c.bf16 %v349, %v349
    %v356 = vpack.c.bf16 %v350, %v350
    %v357 = vld [vmem:[%s6] sm:$0xf]
    %v358 = vld [vmem:[%s6 + $0x4] sm:$0xf]
    %v359 = vld [vmem:[%s6 + $0x8] sm:$0xf]
    %v360 = vld [vmem:[%s6 + $0xc] sm:$0xf]
    %v365 = vunpack.c.l.b16 %v357
    %v366 = vunpack.c.l.b16 %v358
    %v367 = vunpack.c.l.b16 %v359
    %v368 = vunpack.c.l.b16 %v360
    %v369 = vpack.c.b16 %v366, %v365
    %v370 = vpack.c.b16 %v368, %v367
    %v372 = vsel %vm93, %v369, 0
    %v375 = vsel %vm93, %v370, 0
    %377 = vmatprep.subr.bf16.mxu0 0
    %378 = vmatpush1.bf16.msra.mxu0 0
    %379 = vmatprep.subr.bf16.mxu0 0
    %380 = vmatpush1.bf16.msra.mxu0 0
    %381 = vmatprep.subr.bf16.mxu0 0
    %382 = vmatpush1.bf16.msra.mxu0 0
    %383 = vmatprep.subr.bf16.mxu0 0
    %384 = vmatpush1.bf16.msra.mxu0 0
    %385 = vmatprep.subr.bf16.mxu0 0
    %386 = vmatpush1.bf16.msra.mxu0 0
    %387 = vmatprep.subr.bf16.mxu0 0
    %388 = vmatpush1.bf16.msra.mxu0 0
    %389 = vmatprep.subr.bf16.mxu0 0
    %390 = vmatpush1.bf16.msra.mxu0 0
    %391 = vmatprep.subr.bf16.mxu0 %v90
    %392 = vmatpush1.bf16.msra.mxu0 %v89
    %393 = vmatprep.subr.bf16.mxu0 0
    %394 = vmatpush2.bf16.msra.mxu0 0
    %395 = vmatprep.subr.bf16.mxu0 0
    %396 = vmatpush2.bf16.msra.mxu0 0
    %397 = vmatprep.subr.bf16.mxu0 0
    %398 = vmatpush2.bf16.msra.mxu0 0
    %399 = vmatprep.subr.bf16.mxu0 0
    %400 = vmatpush2.bf16.msra.mxu0 0
    %401 = vmatprep.subr.bf16.mxu0 0
    %402 = vmatpush2.bf16.msra.mxu0 0
    %403 = vmatprep.subr.bf16.mxu0 0
    %404 = vmatpush2.bf16.msra.mxu0 0
    %405 = vmatprep.subr.bf16.mxu0 0
    %406 = vmatpush2.bf16.msra.mxu0 0
    %407 = vmatprep.subr.bf16.mxu0 0
    %408 = vmatpush2.bf16.msra.mxu0 0
    %409 = vmatprep.mubr.bf16.mxu0 0
    %410 = vmatmul.mubr.bf16.gmra.mxu0 %v372
    %v411 = vpop.f32.mrf.mxu0
    %v412 = vadd.f32 0.0, %v411
    %v413 = vpop.f32.mrf.mxu0
    %v414 = vadd.f32 0.0, %v413
    %v415 = vpop.f32.mrf.mxu0
    %v416 = vadd.f32 0.0, %v415
    %v417 = vpop.f32.mrf.mxu0
    %v418 = vadd.f32 0.0, %v417
    %419 = vmatprep.mubr.bf16.mxu0 0
    %420 = vmatmul.mubr.bf16.gmra.mxu0 %v375
    %v421 = vpop.f32.mrf.mxu0
    %v422 = vadd.f32 0.0, %v421
    %v423 = vpop.f32.mrf.mxu0
    %v424 = vadd.f32 0.0, %v423
    %v425 = vpop.f32.mrf.mxu0
    %v426 = vadd.f32 0.0, %v425
    %v427 = vpop.f32.mrf.mxu0
    %v428 = vadd.f32 0.0, %v427
    %429 = vdwg.mxu0
    %v434 = vunpack.c.l.b16 %v351
    %v435 = vunpack.c.l.b16 %v352
    %v436 = vunpack.c.l.b16 %v353
    %v437 = vunpack.c.l.b16 %v354
    %v438 = vpack.c.b16 %v435, %v434
    %v439 = vpack.c.b16 %v437, %v436
    %vm440 = vcmask 64512
    %v442 = vsel %vm440, %v438, 0
    %v445 = vsel %vm440, %v439, 0
    %v448 = vsel %vm301, %v355, 0
    %v451 = vsel %vm301, %v356, 0
    %453 = vmatprep.subr.bf16.mxu0 0
    %454 = vmatpush1.bf16.msra.mxu0 0
    %455 = vmatprep.subr.bf16.mxu0 0
    %456 = vmatpush1.bf16.msra.mxu0 0
    %457 = vmatprep.subr.bf16.mxu0 0
    %458 = vmatpush1.bf16.msra.mxu0 0
    %459 = vmatprep.subr.bf16.mxu0 0
    %460 = vmatpush1.bf16.msra.mxu0 0
    %461 = vmatprep.subr.bf16.mxu0 0
    %462 = vmatpush1.bf16.msra.mxu0 0
    %463 = vmatprep.subr.bf16.mxu0 0
    %464 = vmatpush1.bf16.msra.mxu0 0
    %465 = vmatprep.subr.bf16.mxu0 0
    %466 = vmatpush1.bf16.msra.mxu0 0
    %467 = vmatprep.subr.bf16.mxu0 %v451
    %468 = vmatpush1.bf16.msra.mxu0 %v448
    %469 = vmatprep.subr.bf16.mxu0 0
    %470 = vmatpush2.bf16.msra.mxu0 0
    %471 = vmatprep.subr.bf16.mxu0 0
    %472 = vmatpush2.bf16.msra.mxu0 0
    %473 = vmatprep.subr.bf16.mxu0 0
    %474 = vmatpush2.bf16.msra.mxu0 0
    %475 = vmatprep.subr.bf16.mxu0 0
    %476 = vmatpush2.bf16.msra.mxu0 0
    %477 = vmatprep.subr.bf16.mxu0 0
    %478 = vmatpush2.bf16.msra.mxu0 0
    %479 = vmatprep.subr.bf16.mxu0 0
    %480 = vmatpush2.bf16.msra.mxu0 0
    %481 = vmatprep.subr.bf16.mxu0 0
    %482 = vmatpush2.bf16.msra.mxu0 0
    %483 = vmatprep.subr.bf16.mxu0 0
    %484 = vmatpush2.bf16.msra.mxu0 0
    %485 = vmatprep.mubr.bf16.mxu0 0
    %486 = vmatmul.mubr.bf16.gmra.mxu0 %v442
    %v487 = vpop.f32.mrf.mxu0
    %v488 = vadd.f32 %v412, %v487
    %v489 = vpop.f32.mrf.mxu0
    %v490 = vadd.f32 %v414, %v489
    %v491 = vpop.f32.mrf.mxu0
    %v492 = vadd.f32 %v416, %v491
    %v493 = vpop.f32.mrf.mxu0
    %v494 = vadd.f32 %v418, %v493
    %495 = vmatprep.mubr.bf16.mxu0 0
    %496 = vmatmul.mubr.bf16.gmra.mxu0 %v445
    %v497 = vpop.f32.mrf.mxu0
    %v498 = vadd.f32 %v422, %v497
    %v499 = vpop.f32.mrf.mxu0
    %v500 = vadd.f32 %v424, %v499
    %v501 = vpop.f32.mrf.mxu0
    %v502 = vadd.f32 %v426, %v501
    %v503 = vpop.f32.mrf.mxu0
    %v504 = vadd.f32 %v428, %v503
    %505 = vdwg.mxu0
    %v506 = vld [vmem:[%s7] sm:$0xff]
    %v507 = vld [vmem:[%s7 + $0x8] sm:$0xff]
    %v508 = vld [vmem:[%s7 + $0x10] sm:$0xff]
    %v509 = vld [vmem:[%s7 + $0x18] sm:$0xff]
    %511 = vset.pattern.permute.xlu0 0
    %512 = vperm.xlu0 %511, %v506
    %v513 = vpop.permute.xlu0 %512
    %516 = vset.pattern.permute.xlu0 0
    %517 = vperm.xlu0 %516, %v507
    %v518 = vpop.permute.xlu0 %517
    %521 = vset.pattern.permute.xlu0 0
    %522 = vperm.xlu0 %521, %v508
    %v523 = vpop.permute.xlu0 %522
    %526 = vset.pattern.permute.xlu0 0
    %527 = vperm.xlu0 %526, %v509
    %v528 = vpop.permute.xlu0 %527
    %v530 = vadd.f32 %v488, %v513
    %v531 = vadd.f32 %v490, %v513
    %v532 = vadd.f32 %v492, %v518
    %v533 = vadd.f32 %v494, %v518
    %v534 = vadd.f32 %v498, %v523
    %v535 = vadd.f32 %v500, %v523
    %v536 = vadd.f32 %v502, %v528
    %v537 = vadd.f32 %v504, %v528
    %v538 = vmax.f32 %v530, 0.0
    %v539 = vmax.f32 %v531, 0.0
    %v540 = vmax.f32 %v532, 0.0
    %v541 = vmax.f32 %v533, 0.0
    %v542 = vmax.f32 %v534, 0.0
    %v543 = vmax.f32 %v535, 0.0
    %v544 = vmax.f32 %v536, 0.0
    %v545 = vmax.f32 %v537, 0.0
    %546 = vst [vmem:[#allocation3] sm:$0xff] %v538
    %547 = vst [vmem:[#allocation3 + $0x8] sm:$0xff] %v539
    %548 = vst [vmem:[#allocation3 + $0x10] sm:$0xff] %v540
    %549 = vst [vmem:[#allocation3 + $0x18] sm:$0xff] %v541
    %550 = vst [vmem:[#allocation3 + $0x20] sm:$0xff] %v542
    %551 = vst [vmem:[#allocation3 + $0x28] sm:$0xff] %v543
    %552 = vst [vmem:[#allocation3 + $0x30] sm:$0xff] %v544
    %553 = vst [vmem:[#allocation3 + $0x38] sm:$0xff] %v545
    %s554 = scalar_lea.vmem %s0, 16
    %v555 = vld [vmem:[%s554] sm:$0xff]
    %v556 = vld [vmem:[%s554 + $0x8] sm:$0xff]
    %v557 = vld [vmem:[%s1] sm:$0xf]
    %v558 = vld [vmem:[%s2] sm:$0xff]
    %560 = vset.pattern.permute.xlu0 0
    %561 = vperm.xlu0 %560, %v558
    %v562 = vpop.permute.xlu0 %561
    %v566 = vunpack.c.l.b16 %v555
    %v567 = vunpack.c.h.b16 %v555
    %v568 = vunpack.c.l.b16 %v556
    %v569 = vunpack.c.h.b16 %v556
    %v570 = vpack.c.b16 %v568, %v566
    %v571 = vpack.c.b16 %v569, %v567
    %v575 = vsel %vm93, %v557, 0
    %577 = vmatprep.subr.bf16.mxu0 0
    %578 = vmatpush1.bf16.msra.mxu0 0
    %579 = vmatprep.subr.bf16.mxu0 0
    %580 = vmatpush1.bf16.msra.mxu0 0
    %581 = vmatprep.subr.bf16.mxu0 0
    %582 = vmatpush1.bf16.msra.mxu0 0
    %583 = vmatprep.subr.bf16.mxu0 0
    %584 = vmatpush1.bf16.msra.mxu0 0
    %585 = vmatprep.subr.bf16.mxu0 0
    %586 = vmatpush1.bf16.msra.mxu0 0
    %587 = vmatprep.subr.bf16.mxu0 0
    %588 = vmatpush1.bf16.msra.mxu0 0
    %589 = vmatprep.subr.bf16.mxu0 0
    %590 = vmatpush1.bf16.msra.mxu0 0
    %591 = vmatprep.subr.bf16.mxu0 %v571
    %592 = vmatpush1.bf16.msra.mxu0 %v570
    %593 = vmatprep.subr.bf16.mxu0 0
    %594 = vmatpush2.bf16.msra.mxu0 0
    %595 = vmatprep.subr.bf16.mxu0 0
    %596 = vmatpush2.bf16.msra.mxu0 0
    %597 = vmatprep.subr.bf16.mxu0 0
    %598 = vmatpush2.bf16.msra.mxu0 0
    %599 = vmatprep.subr.bf16.mxu0 0
    %600 = vmatpush2.bf16.msra.mxu0 0
    %601 = vmatprep.subr.bf16.mxu0 0
    %602 = vmatpush2.bf16.msra.mxu0 0
    %603 = vmatprep.subr.bf16.mxu0 0
    %604 = vmatpush2.bf16.msra.mxu0 0
    %605 = vmatprep.subr.bf16.mxu0 0
    %606 = vmatpush2.bf16.msra.mxu0 0
    %607 = vmatprep.subr.bf16.mxu0 0
    %608 = vmatpush2.bf16.msra.mxu0 0
    %609 = vmatprep.mubr.bf16.mxu0 0
    %610 = vmatmul.mubr.bf16.gmra.mxu0 %v575
    %v611 = vpop.f32.mrf.mxu0
    %v612 = vadd.f32 %v562, %v611
    %v613 = vpop.f32.mrf.mxu0
    %v614 = vadd.f32 %v562, %v613
    %v615 = vpop.f32.mrf.mxu0
    %v616 = vpop.f32.mrf.mxu0
    %617 = vdwg.mxu0
    %v618 = vmax.f32 %v612, 0.0
    %v619 = vmax.f32 %v614, 0.0
    %620 = vrot.lane.b32.xlu0 %v618, 17
    %v621 = vpop.permute.xlu0 %620
    %622 = vrot.lane.b32.xlu0 %v619, 17
    %v623 = vpop.permute.xlu0 %622
    %v624 = vsel %vm144, %v621, %v623
    %v625 = vsel %vm144, %v623, %v621
    %v626 = vsel %vm149, %v625, 0.0
    %v627 = vsel %vm150, %v624, 0.0
    %628 = vst [vmem:[#allocation2] sm:$0xff] %v626
    %629 = vst [vmem:[#allocation2 + $0x8] sm:$0xff] %v627
    %630 = vrot.lane.b32.xlu0 %v618, 16
    %v631 = vpop.permute.xlu0 %630
    %632 = vrot.lane.b32.xlu0 %v619, 16
    %v633 = vpop.permute.xlu0 %632
    %v634 = vsel %vm159, %v631, %v633
    %v635 = vsel %vm159, %v633, %v631
    %v636 = vsel %vm164, %v635, 0.0
    %v637 = vsel %vm165, %v634, 0.0
    %638 = vst [vmem:[#allocation2 + $0x10] sm:$0xff] %v636
    %639 = vst [vmem:[#allocation2 + $0x18] sm:$0xff] %v637
    %640 = vrot.lane.b32.xlu0 %v618, 15
    %v641 = vpop.permute.xlu0 %640
    %642 = vrot.lane.b32.xlu0 %v619, 15
    %v643 = vpop.permute.xlu0 %642
    %v644 = vsel %vm174, %v641, %v643
    %v645 = vsel %vm174, %v643, %v641
    %v646 = vsel %vm179, %v645, 0.0
    %v647 = vsel %vm180, %v644, 0.0
    %648 = vst [vmem:[#allocation2 + $0x20] sm:$0xff] %v646
    %649 = vst [vmem:[#allocation2 + $0x28] sm:$0xff] %v647
    %650 = vrot.lane.b32.xlu0 %v618, 1
    %v651 = vpop.permute.xlu0 %650
    %652 = vrot.lane.b32.xlu0 %v619, 1
    %v653 = vpop.permute.xlu0 %652
    %v654 = vsel %vm189, %v651, %v653
    %v655 = vsel %vm189, %v653, %v651
    %v656 = vsel %vm194, %v655, 0.0
    %v657 = vsel %vm195, %v654, 0.0
    %658 = vst [vmem:[#allocation2 + $0x30] sm:$0xff] %v656
    %659 = vst [vmem:[#allocation2 + $0x38] sm:$0xff] %v657
    %660 = vst [vmem:[#allocation2 + $0x40] sm:$0xff] %v618
    %661 = vst [vmem:[#allocation2 + $0x48] sm:$0xff] %v619
    %662 = vrot.lane.b32.xlu0 %v618, 127
    %v663 = vpop.permute.xlu0 %662
    %664 = vrot.lane.b32.xlu0 %v619, 127
    %v665 = vpop.permute.xlu0 %664
    %v666 = vsel %vm206, %v663, %v665
    %v667 = vsel %vm206, %v665, %v663
    %v668 = vsel %vm211, %v666, 0.0
    %v669 = vsel %vm212, %v667, 0.0
    %670 = vst [vmem:[#allocation2 + $0x50] sm:$0xff] %v668
    %671 = vst [vmem:[#allocation2 + $0x58] sm:$0xff] %v669
    %672 = vrot.lane.b32.xlu0 %v618, 113
    %v673 = vpop.permute.xlu0 %672
    %674 = vrot.lane.b32.xlu0 %v619, 113
    %v675 = vpop.permute.xlu0 %674
    %v676 = vsel %vm221, %v673, %v675
    %v677 = vsel %vm221, %v675, %v673
    %v678 = vsel %vm226, %v676, 0.0
    %v679 = vsel %vm227, %v677, 0.0
    %680 = vst [vmem:[#allocation2 + $0x60] sm:$0xff] %v678
    %681 = vst [vmem:[#allocation2 + $0x68] sm:$0xff] %v679
    %682 = vrot.lane.b32.xlu0 %v618, 112
    %v683 = vpop.permute.xlu0 %682
    %684 = vrot.lane.b32.xlu0 %v619, 112
    %v685 = vpop.permute.xlu0 %684
    %v686 = vsel %vm236, %v683, %v685
    %v687 = vsel %vm236, %v685, %v683
    %v688 = vsel %vm241, %v686, 0.0
    %v689 = vsel %vm242, %v687, 0.0
    %690 = vst [vmem:[#allocation2 + $0x70] sm:$0xff] %v688
    %691 = vst [vmem:[#allocation2 + $0x78] sm:$0xff] %v689
    %692 = vrot.lane.b32.xlu0 %v618, 111
    %v693 = vpop.permute.xlu0 %692
    %694 = vrot.lane.b32.xlu0 %v619, 111
    %v695 = vpop.permute.xlu0 %694
    %v696 = vsel %vm251, %v693, %v695
    %v697 = vsel %vm251, %v695, %v693
    %v698 = vsel %vm256, %v696, 0.0
    %v699 = vsel %vm257, %v697, 0.0
    %700 = vst [vmem:[#allocation2 + $0x80] sm:$0xff] %v698
    %701 = vst [vmem:[#allocation2 + $0x88] sm:$0xff] %v699
    %v702 = vld [vmem:[%s3] sm:$0xf]
    %v703 = vld [vmem:[#allocation2] sm:$0xff]
    %v704 = vld [vmem:[#allocation2 + $0x8] sm:$0xff]
    %v705 = vld [vmem:[#allocation2 + $0x10] sm:$0xff]
    %v706 = vld [vmem:[#allocation2 + $0x18] sm:$0xff]
    %v707 = vld [vmem:[#allocation2 + $0x20] sm:$0xff]
    %v708 = vld [vmem:[#allocation2 + $0x28] sm:$0xff]
    %v709 = vld [vmem:[#allocation2 + $0x30] sm:$0xff]
    %v710 = vld [vmem:[#allocation2 + $0x38] sm:$0xff]
    %v711 = vld [vmem:[#allocation2 + $0x40] sm:$0xff]
    %v712 = vld [vmem:[#allocation2 + $0x48] sm:$0xff]
    %v713 = vld [vmem:[#allocation2 + $0x50] sm:$0xff]
    %v714 = vld [vmem:[#allocation2 + $0x58] sm:$0xff]
    %v715 = vld [vmem:[#allocation2 + $0x60] sm:$0xff]
    %v716 = vld [vmem:[#allocation2 + $0x68] sm:$0xff]
    %v717 = vld [vmem:[#allocation2 + $0x70] sm:$0xff]
    %v718 = vld [vmem:[#allocation2 + $0x78] sm:$0xff]
    %v719 = vld [vmem:[#allocation2 + $0x80] sm:$0xff]
    %v720 = vld [vmem:[#allocation2 + $0x88] sm:$0xff]
    %v721 = vpack.c.bf16 %v705, %v703
    %v722 = vpack.c.bf16 %v706, %v704
    %v723 = vpack.c.bf16 %v709, %v707
    %v724 = vpack.c.bf16 %v710, %v708
    %v725 = vpack.c.bf16 %v713, %v711
    %v726 = vpack.c.bf16 %v714, %v712
    %v727 = vpack.c.bf16 %v717, %v715
    %v728 = vpack.c.bf16 %v718, %v716
    %v729 = vpack.c.bf16 %v719, %v719
    %v730 = vpack.c.bf16 %v720, %v720
    %v731 = vld [vmem:[%s4] sm:$0xff]
    %733 = vset.pattern.permute.xlu0 0
    %734 = vperm.xlu0 %733, %v731
    %v735 = vpop.permute.xlu0 %734
    %v738 = vsel %vm297, %v702, 0
    %v741 = vsel %vm301, %v729, 0
    %v744 = vsel %vm301, %v730, 0
    %746 = vmatprep.subr.bf16.mxu0 0
    %747 = vmatpush1.bf16.msra.mxu0 0
    %748 = vmatprep.subr.bf16.mxu0 0
    %749 = vmatpush1.bf16.msra.mxu0 0
    %750 = vmatprep.subr.bf16.mxu0 0
    %751 = vmatpush1.bf16.msra.mxu0 0
    %752 = vmatprep.subr.bf16.mxu0 %v744
    %753 = vmatpush1.bf16.msra.mxu0 %v741
    %754 = vmatprep.subr.bf16.mxu0 %v728
    %755 = vmatpush1.bf16.msra.mxu0 %v727
    %756 = vmatprep.subr.bf16.mxu0 %v726
    %757 = vmatpush1.bf16.msra.mxu0 %v725
    %758 = vmatprep.subr.bf16.mxu0 %v724
    %759 = vmatpush1.bf16.msra.mxu0 %v723
    %760 = vmatprep.subr.bf16.mxu0 %v722
    %761 = vmatpush1.bf16.msra.mxu0 %v721
    %762 = vmatprep.subr.bf16.mxu0 0
    %763 = vmatpush2.bf16.msra.mxu0 0
    %764 = vmatprep.subr.bf16.mxu0 0
    %765 = vmatpush2.bf16.msra.mxu0 0
    %766 = vmatprep.subr.bf16.mxu0 0
    %767 = vmatpush2.bf16.msra.mxu0 0
    %768 = vmatprep.subr.bf16.mxu0 0
    %769 = vmatpush2.bf16.msra.mxu0 0
    %770 = vmatprep.subr.bf16.mxu0 0
    %771 = vmatpush2.bf16.msra.mxu0 0
    %772 = vmatprep.subr.bf16.mxu0 0
    %773 = vmatpush2.bf16.msra.mxu0 0
    %774 = vmatprep.subr.bf16.mxu0 0
    %775 = vmatpush2.bf16.msra.mxu0 0
    %776 = vmatprep.subr.bf16.mxu0 0
    %777 = vmatpush2.bf16.msra.mxu0 0
    %778 = vmatprep.mubr.bf16.mxu0 0
    %779 = vmatmul.mubr.bf16.gmra.mxu0 %v738
    %v780 = vpop.f32.mrf.mxu0
    %v781 = vadd.f32 %v735, %v780
    %v782 = vpop.f32.mrf.mxu0
    %v783 = vadd.f32 %v735, %v782
    %v784 = vpop.f32.mrf.mxu0
    %v785 = vpop.f32.mrf.mxu0
    %786 = vdwg.mxu0
    %v787 = vmax.f32 %v781, 0.0
    %v788 = vmax.f32 %v783, 0.0
    %v789 = vld [vmem:[%s5] sm:$0xf]
    %v790 = vld [vmem:[%s5 + $0x4] sm:$0xf]
    %v791 = vld [vmem:[%s5 + $0x8] sm:$0xf]
    %v792 = vld [vmem:[%s5 + $0xc] sm:$0xf]
    %v793 = vpack.c.bf16 %v787, %v787
    %v794 = vpack.c.bf16 %v788, %v788
    %v795 = vld [vmem:[%s6] sm:$0xf]
    %v796 = vld [vmem:[%s6 + $0x4] sm:$0xf]
    %v797 = vld [vmem:[%s6 + $0x8] sm:$0xf]
    %v798 = vld [vmem:[%s6 + $0xc] sm:$0xf]
    %v803 = vunpack.c.l.b16 %v795
    %v804 = vunpack.c.l.b16 %v796
    %v805 = vunpack.c.l.b16 %v797
    %v806 = vunpack.c.l.b16 %v798
    %v807 = vpack.c.b16 %v804, %v803
    %v808 = vpack.c.b16 %v806, %v805
    %v810 = vsel %vm93, %v807, 0
    %v813 = vsel %vm93, %v808, 0
    %815 = vmatprep.subr.bf16.mxu0 0
    %816 = vmatpush1.bf16.msra.mxu0 0
    %817 = vmatprep.subr.bf16.mxu0 0
    %818 = vmatpush1.bf16.msra.mxu0 0
    %819 = vmatprep.subr.bf16.mxu0 0
    %820 = vmatpush1.bf16.msra.mxu0 0
    %821 = vmatprep.subr.bf16.mxu0 0
    %822 = vmatpush1.bf16.msra.mxu0 0
    %823 = vmatprep.subr.bf16.mxu0 0
    %824 = vmatpush1.bf16.msra.mxu0 0
    %825 = vmatprep.subr.bf16.mxu0 0
    %826 = vmatpush1.bf16.msra.mxu0 0
    %827 = vmatprep.subr.bf16.mxu0 0
    %828 = vmatpush1.bf16.msra.mxu0 0
    %829 = vmatprep.subr.bf16.mxu0 %v571
    %830 = vmatpush1.bf16.msra.mxu0 %v570
    %831 = vmatprep.subr.bf16.mxu0 0
    %832 = vmatpush2.bf16.msra.mxu0 0
    %833 = vmatprep.subr.bf16.mxu0 0
    %834 = vmatpush2.bf16.msra.mxu0 0
    %835 = vmatprep.subr.bf16.mxu0 0
    %836 = vmatpush2.bf16.msra.mxu0 0
    %837 = vmatprep.subr.bf16.mxu0 0
    %838 = vmatpush2.bf16.msra.mxu0 0
    %839 = vmatprep.subr.bf16.mxu0 0
    %840 = vmatpush2.bf16.msra.mxu0 0
    %841 = vmatprep.subr.bf16.mxu0 0
    %842 = vmatpush2.bf16.msra.mxu0 0
    %843 = vmatprep.subr.bf16.mxu0 0
    %844 = vmatpush2.bf16.msra.mxu0 0
    %845 = vmatprep.subr.bf16.mxu0 0
    %846 = vmatpush2.bf16.msra.mxu0 0
    %847 = vmatprep.mubr.bf16.mxu0 0
    %848 = vmatmul.mubr.bf16.gmra.mxu0 %v810
    %v849 = vpop.f32.mrf.mxu0
    %v850 = vadd.f32 0.0, %v849
    %v851 = vpop.f32.mrf.mxu0
    %v852 = vadd.f32 0.0, %v851
    %v853 = vpop.f32.mrf.mxu0
    %v854 = vadd.f32 0.0, %v853
    %v855 = vpop.f32.mrf.mxu0
    %v856 = vadd.f32 0.0, %v855
    %857 = vmatprep.mubr.bf16.mxu0 0
    %858 = vmatmul.mubr.bf16.gmra.mxu0 %v813
    %v859 = vpop.f32.mrf.mxu0
    %v860 = vadd.f32 0.0, %v859
    %v861 = vpop.f32.mrf.mxu0
    %v862 = vadd.f32 0.0, %v861
    %v863 = vpop.f32.mrf.mxu0
    %v864 = vadd.f32 0.0, %v863
    %v865 = vpop.f32.mrf.mxu0
    %v866 = vadd.f32 0.0, %v865
    %867 = vdwg.mxu0
    %v872 = vunpack.c.l.b16 %v789
    %v873 = vunpack.c.l.b16 %v790
    %v874 = vunpack.c.l.b16 %v791
    %v875 = vunpack.c.l.b16 %v792
    %v876 = vpack.c.b16 %v873, %v872
    %v877 = vpack.c.b16 %v875, %v874
    %v879 = vsel %vm440, %v876, 0
    %v882 = vsel %vm440, %v877, 0
    %v885 = vsel %vm301, %v793, 0
    %v888 = vsel %vm301, %v794, 0
    %890 = vmatprep.subr.bf16.mxu0 0
    %891 = vmatpush1.bf16.msra.mxu0 0
    %892 = vmatprep.subr.bf16.mxu0 0
    %893 = vmatpush1.bf16.msra.mxu0 0
    %894 = vmatprep.subr.bf16.mxu0 0
    %895 = vmatpush1.bf16.msra.mxu0 0
    %896 = vmatprep.subr.bf16.mxu0 0
    %897 = vmatpush1.bf16.msra.mxu0 0
    %898 = vmatprep.subr.bf16.mxu0 0
    %899 = vmatpush1.bf16.msra.mxu0 0
    %900 = vmatprep.subr.bf16.mxu0 0
    %901 = vmatpush1.bf16.msra.mxu0 0
    %902 = vmatprep.subr.bf16.mxu0 0
    %903 = vmatpush1.bf16.msra.mxu0 0
    %904 = vmatprep.subr.bf16.mxu0 %v888
    %905 = vmatpush1.bf16.msra.mxu0 %v885
    %906 = vmatprep.subr.bf16.mxu0 0
    %907 = vmatpush2.bf16.msra.mxu0 0
    %908 = vmatprep.subr.bf16.mxu0 0
    %909 = vmatpush2.bf16.msra.mxu0 0
    %910 = vmatprep.subr.bf16.mxu0 0
    %911 = vmatpush2.bf16.msra.mxu0 0
    %912 = vmatprep.subr.bf16.mxu0 0
    %913 = vmatpush2.bf16.msra.mxu0 0
    %914 = vmatprep.subr.bf16.mxu0 0
    %915 = vmatpush2.bf16.msra.mxu0 0
    %916 = vmatprep.subr.bf16.mxu0 0
    %917 = vmatpush2.bf16.msra.mxu0 0
    %918 = vmatprep.subr.bf16.mxu0 0
    %919 = vmatpush2.bf16.msra.mxu0 0
    %920 = vmatprep.subr.bf16.mxu0 0
    %921 = vmatpush2.bf16.msra.mxu0 0
    %922 = vmatprep.mubr.bf16.mxu0 0
    %923 = vmatmul.mubr.bf16.gmra.mxu0 %v879
    %v924 = vpop.f32.mrf.mxu0
    %v925 = vadd.f32 %v850, %v924
    %v926 = vpop.f32.mrf.mxu0
    %v927 = vadd.f32 %v852, %v926
    %v928 = vpop.f32.mrf.mxu0
    %v929 = vadd.f32 %v854, %v928
    %v930 = vpop.f32.mrf.mxu0
    %v931 = vadd.f32 %v856, %v930
    %932 = vmatprep.mubr.bf16.mxu0 0
    %933 = vmatmul.mubr.bf16.gmra.mxu0 %v882
    %v934 = vpop.f32.mrf.mxu0
    %v935 = vadd.f32 %v860, %v934
    %v936 = vpop.f32.mrf.mxu0
    %v937 = vadd.f32 %v862, %v936
    %v938 = vpop.f32.mrf.mxu0
    %v939 = vadd.f32 %v864, %v938
    %v940 = vpop.f32.mrf.mxu0
    %v941 = vadd.f32 %v866, %v940
    %942 = vdwg.mxu0
    %v943 = vld [vmem:[%s7] sm:$0xff]
    %v944 = vld [vmem:[%s7 + $0x8] sm:$0xff]
    %v945 = vld [vmem:[%s7 + $0x10] sm:$0xff]
    %v946 = vld [vmem:[%s7 + $0x18] sm:$0xff]
    %948 = vset.pattern.permute.xlu0 0
    %949 = vperm.xlu0 %948, %v943
    %v950 = vpop.permute.xlu0 %949
    %953 = vset.pattern.permute.xlu0 0
    %954 = vperm.xlu0 %953, %v944
    %v955 = vpop.permute.xlu0 %954
    %958 = vset.pattern.permute.xlu0 0
    %959 = vperm.xlu0 %958, %v945
    %v960 = vpop.permute.xlu0 %959
    %963 = vset.pattern.permute.xlu0 0
    %964 = vperm.xlu0 %963, %v946
    %v965 = vpop.permute.xlu0 %964
    %v967 = vadd.f32 %v925, %v950
    %v968 = vadd.f32 %v927, %v950
    %v969 = vadd.f32 %v929, %v955
    %v970 = vadd.f32 %v931, %v955
    %v971 = vadd.f32 %v935, %v960
    %v972 = vadd.f32 %v937, %v960
    %v973 = vadd.f32 %v939, %v965
    %v974 = vadd.f32 %v941, %v965
    %v975 = vmax.f32 %v967, 0.0
    %v976 = vmax.f32 %v968, 0.0
    %v977 = vmax.f32 %v969, 0.0
    %v978 = vmax.f32 %v970, 0.0
    %v979 = vmax.f32 %v971, 0.0
    %v980 = vmax.f32 %v972, 0.0
    %v981 = vmax.f32 %v973, 0.0
    %v982 = vmax.f32 %v974, 0.0
    %s983 = scalar_lea.vmem [#allocation3], 64
    %984 = vst [vmem:[%s983] sm:$0xff] %v975
    %985 = vst [vmem:[%s983 + $0x8] sm:$0xff] %v976
    %986 = vst [vmem:[%s983 + $0x10] sm:$0xff] %v977
    %987 = vst [vmem:[%s983 + $0x18] sm:$0xff] %v978
    %988 = vst [vmem:[%s983 + $0x20] sm:$0xff] %v979
    %989 = vst [vmem:[%s983 + $0x28] sm:$0xff] %v980
    %990 = vst [vmem:[%s983 + $0x30] sm:$0xff] %v981
    %991 = vst [vmem:[%s983 + $0x38] sm:$0xff] %v982
    // Predicated region
    $region34: #{tpu_custom_call.1} parent=1 // pred_check
      _
    $region35: #{tpu_custom_call.1} parent=1 // pred_check_branch
      %993 = sbr.rel (0) target = $region37
    $region36: #{tpu_custom_call.1} parent=1 // pred_region
      %s995 = ssub.s32 2048, 2048
      %996 = vsyncadd [#allocation4], %s995
      %s997 = sshll.u32 [#allocation3], 4
      %s998 = int_to_ptr.vmem [resolvable:$true] %s997
      %1003 = dma.vmem_to_hbm [thread:$0]  %s998, 2048, %s8, [#allocation4], 256, 256, 16
    $region37: #{tpu_custom_call.1} parent=1 // pred_fallthru
      _
    // Predicated region
    $region38: #{tpu_custom_call.1} parent=1 // pred_check
      _
    $region39: #{tpu_custom_call.1} parent=1 // pred_check_branch
      %1005 = sbr.rel (0) target = $region41
    $region40: #{tpu_custom_call.1} parent=1 // pred_region
      %1006 = dma.done [#allocation4], 2048
    $region41: #{tpu_custom_call.1} parent=1 // pred_fallthru
      _
    %1007 = vsyncpa [#allocation4], 1

</llo_original>
